<compile_context>
chip_gen: v6e
topology: v6e:2x2x1
jax: 0.10.0
libtpu: 0.0.40
codegen_flags: <defaults>
</compile_context>

<pallas_src>
import functools

import jax
import jax.numpy as jnp
from jax.experimental import pallas as pl
from jax.experimental.pallas import tpu as pltpu

# ----------------------------- hyper-parameters -----------------------------
T_OBS, T_PRED = 8, 12          # obs_len, pred_len
K = 6                          # number of eigen-coefficients
S = 4                          # num_samples
DIM = 2                        # traj_dim
STATIC_DIST = 0.3              # static_dist threshold
N_PED = 8
IMG_C, IMG_H, IMG_W = 4, 16, 16

D_OBS = T_OBS * DIM            # flattened obs trajectory length (x-block then y-block)
D_PRED = T_PRED * DIM
FEAT_DIM = K + 2 + IMG_C       # baseline-head input features


# ------------------------------ fused kernel body ----------------------------
def _et_core(obs_x, obs_y, scene, u_obs_t, u_big, anch_m, anch_s, w, b, pred=None):
    """Fused EigenTrajectory forward.  All inputs are VMEM-resident arrays with the
    pedestrian axis in lanes.  Returns (out_xy, losses_or_None)."""
    n = obs_x.shape[1]

    # ---- per-pedestrian TrajNorm parameters, all (1, N) ----
    ori_x = obs_x[T_OBS - 1:T_OBS, :]
    ori_y = obs_y[T_OBS - 1:T_OBS, :]
    disp_x = ori_x - obs_x[T_OBS - 3:T_OBS - 2, :]
    disp_y = ori_y - obs_y[T_OBS - 3:T_OBS - 2, :]
    nrm = jnp.sqrt(disp_x * disp_x + disp_y * disp_y)
    mask = (nrm * 0.5) > STATIC_DIST                       # moving-pedestrian mask
    safe = nrm > 1e-12
    inv_nrm = jnp.where(safe, 1.0 / jnp.maximum(nrm, 1e-12), 0.0)
    cth = jnp.where(safe, disp_x * inv_nrm, 1.0)           # cos(theta)
    sth = jnp.where(safe, disp_y * inv_nrm, 0.0)           # sin(theta)
    sca_m = 2.0 * inv_nrm                                  # moving-branch scale, finite

    def rotate(tx, ty):                                    # normalize: shift + rotate
        dx = tx - ori_x
        dy = ty - ori_y
        return dx * cth + dy * sth, -dx * sth + dy * cth

    # ---- ETDescriptor.projection (obs): one stacked masked matmul ----
    onx, ony = rotate(obs_x, obs_y)                        # (T_OBS, N)
    x_obs = jnp.concatenate([
        jnp.where(mask, onx * sca_m, 0.0),                 # moving branch (norm_sca=True)
        jnp.where(mask, ony * sca_m, 0.0),
        jnp.where(mask, 0.0, onx),                         # static branch (norm_sca=False)
        jnp.where(mask, 0.0, ony)], axis=0)                # (2*D_OBS, N)
    c_obs = jnp.dot(u_obs_t, x_obs, preferred_element_type=jnp.float32)    # (K, N)

    # ---- mean-centered origins + scene features ----
    oxc = ori_x - jnp.mean(ori_x, axis=1, keepdims=True)
    oyc = ori_y - jnp.mean(ori_y, axis=1, keepdims=True)
    # TODO(synk): Modified_Res18 scene backbone has no definition here; replaced by a
    # deterministic global-average-pool feature of the flattened scene image.
    feat = jnp.mean(scene, axis=1, keepdims=True)          # (IMG_C, 1)
    feat_b = jnp.broadcast_to(feat, (scene.shape[0], n))

    # ---- baseline model via hooks ----
    # TODO(synk): baseline_model / hook_func are external; replaced by a deterministic
    # linear head mapping [C_obs; obs_ori; scene_feat] -> (S*K, N).
    x_base = jnp.concatenate([c_obs, oxc, oyc, feat_b], axis=0)            # (FEAT_DIM, N)
    y_base = jnp.dot(w, x_base, preferred_element_type=jnp.float32) + b    # (S*K, N)

    # ---- ETAnchor + ETDescriptor.reconstruction : one stacked masked matmul ----
    c_pred = y_base + jnp.where(mask, anch_m, anch_s)      # (S*K, N), row = s*K + k
    c_stack = jnp.concatenate([jnp.where(mask, c_pred, 0.0),
                               jnp.where(mask, 0.0, c_pred)], axis=0)      # (2*S*K, N)
    recon = jnp.dot(u_big, c_stack, preferred_element_type=jnp.float32)    # (2*S*T_PRED, N)
    rx = recon[:S * T_PRED, :]                             # normalized x, row = s*T_PRED + t
    ry = recon[S * T_PRED:, :]                             # normalized y

    # ---- denormalize: / scale, rotate back, + origin ----
    inv_sca = jnp.where(mask, nrm * 0.5, 1.0)              # 1/sca, no division / no inf
    rxd = rx * inv_sca
    ryd = ry * inv_sca
    fx = rxd * cth - ryd * sth + ori_x                     # (S*T_PRED, N)
    fy = rxd * sth + ryd * cth + ori_y
    out_xy = jnp.concatenate([fx, fy], axis=0)             # (2*S*T_PRED, N)

    if pred is None:
        return out_xy, None

    pred_x, pred_y, u_pred_t, g_k, g_disp = pred

    # ---- ground-truth projection (same normalizer params as obs) ----
    pnx, pny = rotate(pred_x, pred_y)                      # (T_PRED, N)
    x_pred = jnp.concatenate([
        jnp.where(mask, pnx * sca_m, 0.0),
        jnp.where(mask, pny * sca_m, 0.0),
        jnp.where(mask, 0.0, pnx),
        jnp.where(mask, 0.0, pny)], axis=0)                # (2*D_PRED, N)
    c_pred_gt = jnp.dot(u_pred_t, x_pred, preferred_element_type=jnp.float32)   # (K, N)

    # ---- losses (selector-matrix reductions, all in-kernel) ----
    dc = c_pred - jnp.concatenate([c_pred_gt] * S, axis=0)                 # (S*K, N)
    ec = jnp.sqrt(jnp.dot(g_k, dc * dc, preferred_element_type=jnp.float32))  # (S, N)
    l_eig = jnp.mean(jnp.min(ec, axis=0, keepdims=True), axis=1, keepdims=True)

    dfx = fx - jnp.concatenate([pred_x] * S, axis=0)
    dfy = fy - jnp.concatenate([pred_y] * S, axis=0)
    ed = jnp.sqrt(dfx * dfx + dfy * dfy)                                   # (S*T_PRED, N)
    ade_fde = jnp.dot(g_disp, ed, preferred_element_type=jnp.float32)      # (2*S, N)
    l_ade = jnp.mean(jnp.min(ade_fde[:S, :], axis=0, keepdims=True),
                     axis=1, keepdims=True)
    l_fde = jnp.mean(jnp.min(ade_fde[S:, :], axis=0, keepdims=True),
                     axis=1, keepdims=True)
    losses = jnp.concatenate([l_eig, l_ade, l_fde, jnp.zeros_like(l_eig)], axis=0)  # (4, 1)
    return out_xy, losses


def _et_kernel_train(obs_x_ref, obs_y_ref, pred_x_ref, pred_y_ref, scene_ref,
                     u_obs_t_ref, u_pred_t_ref, u_big_ref,
                     anch_m_ref, anch_s_ref, w_ref, b_ref,
                     g_k_ref, g_disp_ref, out_ref, loss_ref):
    out_xy, losses = _et_core(
        obs_x_ref[...], obs_y_ref[...], scene_ref[...],
        u_obs_t_ref[...], u_big_ref[...],
        anch_m_ref[...], anch_s_ref[...], w_ref[...], b_ref[...],
        pred=(pred_x_ref[...], pred_y_ref[...], u_pred_t_ref[...],
              g_k_ref[...], g_disp_ref[...]))
    out_ref[...] = out_xy
    loss_ref[...] = losses


def _et_kernel_infer(obs_x_ref, obs_y_ref, scene_ref, u_obs_t_ref, u_big_ref,
                     anch_m_ref, anch_s_ref, w_ref, b_ref, out_ref):
    out_xy, _ = _et_core(
        obs_x_ref[...], obs_y_ref[...], scene_ref[...],
        u_obs_t_ref[...], u_big_ref[...],
        anch_m_ref[...], anch_s_ref[...], w_ref[...], b_ref[...])
    out_ref[...] = out_xy


# ------------------- parameter-derived constants (glue, const-folded) --------
def _prep_constants(params):
    u_pm, u_ps = params['U_pred_m'], params['U_pred_s']          # (D_PRED, K)
    u_obs_t = jnp.concatenate([params['U_obs_m'].T,
                               params['U_obs_s'].T], axis=1)     # (K, 2*D_OBS)
    u_pred_t = jnp.concatenate([u_pm.T, u_ps.T], axis=1)         # (K, 2*D_PRED)

    eye_s = jnp.eye(S, dtype=jnp.float32)

    def big(u):
        # block-diagonal over samples, rows ordered (coord-major, sample, time)
        ux, uy = u[:T_PRED, :], u[T_PRED:, :]
        return jnp.concatenate([jnp.kron(eye_s, ux),
                                jnp.kron(eye_s, uy)], axis=0)    # (2*S*T_PRED, S*K)

    u_big = jnp.concatenate([big(u_pm), big(u_ps)], axis=1)      # (2*S*T_PRED, 2*S*K)

    anch_m = params['anchor_m'].T.reshape(S * K, 1)              # row = s*K + k
    anch_s = params['anchor_s'].T.reshape(S * K, 1)

    g_k = jnp.kron(eye_s, jnp.ones((1, K), jnp.float32))         # (S, S*K)
    g_ade = jnp.kron(eye_s, jnp.full((1, T_PRED), 1.0 / T_PRED, jnp.float32))
    e_last = jnp.zeros((1, T_PRED), jnp.float32).at[0, T_PRED - 1].set(1.0)
    g_fde = jnp.kron(eye_s, e_last)
    g_disp = jnp.concatenate([g_ade, g_fde], axis=0)             # (2*S, S*T_PRED)
    return u_obs_t, u_pred_t, u_big, anch_m, anch_s, g_k, g_disp


# ------------------------------ parameter init -------------------------------
def init_params(key):
    ks = jax.random.split(key, 7)

    def nrm(k, shape, scale):
        return jax.random.normal(k, shape, jnp.float32) * scale

    return dict(
        # ETDescriptor truncated eigen-bases (synthetic; rows = x-block then y-block)
        U_obs_m=nrm(ks[0], (D_OBS, K), 1.0 / jnp.sqrt(D_OBS)),
        U_obs_s=nrm(ks[1], (D_OBS, K), 1.0 / jnp.sqrt(D_OBS)),
        U_pred_m=nrm(ks[2], (D_PRED, K), 1.0 / jnp.sqrt(D_PRED)),
        U_pred_s=nrm(ks[3], (D_PRED, K), 1.0 / jnp.sqrt(D_PRED)),
        # ETAnchor learned anchors
        anchor_m=nrm(ks[4], (K, S), 0.1),
        anchor_s=nrm(ks[5], (K, S), 0.1),
        # synthetic linear baseline (stand-in for baseline_model + hook_func)
        W_base=nrm(ks[6], (S * K, FEAT_DIM), 1.0 / jnp.sqrt(FEAT_DIM)),
        b_base=jnp.zeros((S * K, 1), jnp.float32),
    )


# --------------------------------- forward -----------------------------------
def eigentrajectory_forward(params, obs_traj, pred_traj, scene_img):
    n = obs_traj.shape[0]
    u_obs_t, u_pred_t, u_big, anch_m, anch_s, g_k, g_disp = _prep_constants(params)

    # lane-dense inputs: pedestrians in lanes, coordinates as separate row blocks
    obs_x = obs_traj[:, :, 0].T                                  # (T_OBS, N)
    obs_y = obs_traj[:, :, 1].T
    scene_flat = scene_img.reshape(IMG_C, IMG_H * IMG_W)         # (C, H*W)

    vmem = functools.partial(pl.BlockSpec, memory_space=pltpu.MemorySpace.VMEM)
    out_xy_shape = jax.ShapeDtypeStruct((2 * S * T_PRED, n), jnp.float32)

    if pred_traj is None:
        out_xy = pl.pallas_call(
            _et_kernel_infer,
            out_shape=out_xy_shape,
            in_specs=[vmem() for _ in range(9)],
            out_specs=vmem(),
        )(obs_x, obs_y, scene_flat, u_obs_t, u_big,
          anch_m, anch_s, params['W_base'], params['b_base'])
        losses = None
    else:
        pred_x = pred_traj[:, :, 0].T                            # (T_PRED, N)
        pred_y = pred_traj[:, :, 1].T
        out_xy, losses = pl.pallas_call(
            _et_kernel_train,
            out_shape=(out_xy_shape, jax.ShapeDtypeStruct((4, 1), jnp.float32)),
            in_specs=[vmem() for _ in range(14)],
            out_specs=(vmem(), vmem()),
        )(obs_x, obs_y, pred_x, pred_y, scene_flat,
          u_obs_t, u_pred_t, u_big, anch_m, anch_s,
          params['W_base'], params['b_base'], g_k, g_disp)

    # user-facing layout (S, N, T_PRED, 2) — tiny output-format glue only
    rx = out_xy[:S * T_PRED, :].reshape(S, T_PRED, n).transpose(0, 2, 1)
    ry = out_xy[S * T_PRED:, :].reshape(S, T_PRED, n).transpose(0, 2, 1)
    recon_traj = jnp.stack([rx, ry], axis=-1)                    # (S, N, T_PRED, 2)

    output = {'recon_traj': recon_traj}
    if losses is not None:
        output['loss_eigentraj'] = losses[0, 0]
        output['loss_euclidean_ade'] = losses[1, 0]
        output['loss_euclidean_fde'] = losses[2, 0]
    return output


# ----------------------------------- main ------------------------------------
if __name__ == "__main__":
    key = jax.random.PRNGKey(0)
    kp, k1, k2, k3 = jax.random.split(key, 4)

    params = init_params(kp)

    # deterministic synthetic trajectories (random-walk style so displacements vary)
    obs_steps = jax.random.normal(k1, (N_PED, T_OBS, DIM), jnp.float32) * 0.3
    obs_traj = jnp.cumsum(obs_steps, axis=1)
    pred_steps = jax.random.normal(k2, (N_PED, T_PRED, DIM), jnp.float32) * 0.3
    pred_traj = obs_traj[:, -1:, :] + jnp.cumsum(pred_steps, axis=1)
    scene_img = jax.random.normal(k3, (IMG_C, IMG_H, IMG_W), jnp.float32)

    # training path (pred_traj given -> losses)
    fwd = jax.jit(functools.partial(eigentrajectory_forward, params))
    out = jax.block_until_ready(fwd(obs_traj, pred_traj, scene_img))
    assert out['recon_traj'].shape == (S, N_PED, T_PRED, DIM)
    assert out['loss_eigentraj'].shape == ()
    assert out['loss_euclidean_ade'].shape == ()
    assert out['loss_euclidean_fde'].shape == ()
    assert bool(jnp.all(jnp.isfinite(out['recon_traj'])))

    # inference path (pred_traj=None -> recon only), as in the reference module
    fwd_inf = jax.jit(
        functools.partial(eigentrajectory_forward, params, pred_traj=None,
                          scene_img=scene_img))
    out_inf = jax.block_until_ready(fwd_inf(obs_traj))
    assert out_inf['recon_traj'].shape == (S, N_PED, T_PRED, DIM)

    print("KERNEL_OK")
</pallas_src>

<mosaic_0001>
module attributes {stable_mosaic.version = 11 : i64} {
  func.func @_et_kernel_train(%arg0: memref<8x8xf32, #tpu.memory_space<vmem>>, %arg1: memref<8x8xf32, #tpu.memory_space<vmem>>, %arg2: memref<12x8xf32, #tpu.memory_space<vmem>>, %arg3: memref<12x8xf32, #tpu.memory_space<vmem>>, %arg4: memref<4x256xf32, #tpu.memory_space<vmem>>, %arg5: memref<6x32xf32, #tpu.memory_space<vmem>>, %arg6: memref<6x48xf32, #tpu.memory_space<vmem>>, %arg7: memref<96x48xf32, #tpu.memory_space<vmem>>, %arg8: memref<24x1xf32, #tpu.memory_space<vmem>>, %arg9: memref<24x1xf32, #tpu.memory_space<vmem>>, %arg10: memref<24x12xf32, #tpu.memory_space<vmem>>, %arg11: memref<24x1xf32, #tpu.memory_space<vmem>>, %arg12: memref<4x24xf32, #tpu.memory_space<vmem>>, %arg13: memref<8x48xf32, #tpu.memory_space<vmem>>, %arg14: memref<96x8xf32, #tpu.memory_space<vmem>>, %arg15: memref<4x1xf32, #tpu.memory_space<vmem>>) attributes {dimension_semantics = [], scalar_prefetch = 0 : i64, scratch_operands = 0 : i64, tpu.core_type = #tpu.core_type<tc>} {
    %c0 = arith.constant 0 : index
    %c0_0 = arith.constant 0 : index
    %0 = vector.load %arg0[%c0, %c0_0] : memref<8x8xf32, #tpu.memory_space<vmem>>, vector<8x8xf32>
    %c0_1 = arith.constant 0 : index
    %c0_2 = arith.constant 0 : index
    %1 = vector.load %arg1[%c0_1, %c0_2] : memref<8x8xf32, #tpu.memory_space<vmem>>, vector<8x8xf32>
    %c0_3 = arith.constant 0 : index
    %c0_4 = arith.constant 0 : index
    %2 = vector.load %arg4[%c0_3, %c0_4] : memref<4x256xf32, #tpu.memory_space<vmem>>, vector<4x256xf32>
    %c0_5 = arith.constant 0 : index
    %c0_6 = arith.constant 0 : index
    %3 = vector.load %arg5[%c0_5, %c0_6] : memref<6x32xf32, #tpu.memory_space<vmem>>, vector<6x32xf32>
    %c0_7 = arith.constant 0 : index
    %c0_8 = arith.constant 0 : index
    %4 = vector.load %arg7[%c0_7, %c0_8] : memref<96x48xf32, #tpu.memory_space<vmem>>, vector<96x48xf32>
    %c0_9 = arith.constant 0 : index
    %c0_10 = arith.constant 0 : index
    %5 = vector.load %arg8[%c0_9, %c0_10] : memref<24x1xf32, #tpu.memory_space<vmem>>, vector<24x1xf32>
    %c0_11 = arith.constant 0 : index
    %c0_12 = arith.constant 0 : index
    %6 = vector.load %arg9[%c0_11, %c0_12] : memref<24x1xf32, #tpu.memory_space<vmem>>, vector<24x1xf32>
    %c0_13 = arith.constant 0 : index
    %c0_14 = arith.constant 0 : index
    %7 = vector.load %arg10[%c0_13, %c0_14] : memref<24x12xf32, #tpu.memory_space<vmem>>, vector<24x12xf32>
    %c0_15 = arith.constant 0 : index
    %c0_16 = arith.constant 0 : index
    %8 = vector.load %arg11[%c0_15, %c0_16] : memref<24x1xf32, #tpu.memory_space<vmem>>, vector<24x1xf32>
    %c0_17 = arith.constant 0 : index
    %c0_18 = arith.constant 0 : index
    %9 = vector.load %arg2[%c0_17, %c0_18] : memref<12x8xf32, #tpu.memory_space<vmem>>, vector<12x8xf32>
    %c0_19 = arith.constant 0 : index
    %c0_20 = arith.constant 0 : index
    %10 = vector.load %arg3[%c0_19, %c0_20] : memref<12x8xf32, #tpu.memory_space<vmem>>, vector<12x8xf32>
    %c0_21 = arith.constant 0 : index
    %c0_22 = arith.constant 0 : index
    %11 = vector.load %arg6[%c0_21, %c0_22] : memref<6x48xf32, #tpu.memory_space<vmem>>, vector<6x48xf32>
    %c0_23 = arith.constant 0 : index
    %c0_24 = arith.constant 0 : index
    %12 = vector.load %arg12[%c0_23, %c0_24] : memref<4x24xf32, #tpu.memory_space<vmem>>, vector<4x24xf32>
    %c0_25 = arith.constant 0 : index
    %c0_26 = arith.constant 0 : index
    %13 = vector.load %arg13[%c0_25, %c0_26] : memref<8x48xf32, #tpu.memory_space<vmem>>, vector<8x48xf32>
    %14 = vector.extract_strided_slice %0 {offsets = [7, 0], sizes = [1, 8], strides = [1, 1]} : vector<8x8xf32> to vector<1x8xf32>
    %15 = vector.extract_strided_slice %1 {offsets = [7, 0], sizes = [1, 8], strides = [1, 1]} : vector<8x8xf32> to vector<1x8xf32>
    %16 = vector.extract_strided_slice %0 {offsets = [5, 0], sizes = [1, 8], strides = [1, 1]} : vector<8x8xf32> to vector<1x8xf32>
    %17 = arith.subf %14, %16 : vector<1x8xf32>
    %18 = vector.extract_strided_slice %1 {offsets = [5, 0], sizes = [1, 8], strides = [1, 1]} : vector<8x8xf32> to vector<1x8xf32>
    %19 = arith.subf %15, %18 : vector<1x8xf32>
    %20 = arith.mulf %17, %17 : vector<1x8xf32>
    %21 = arith.mulf %19, %19 : vector<1x8xf32>
    %22 = arith.addf %20, %21 : vector<1x8xf32>
    %23 = math.sqrt %22 : vector<1x8xf32>
    %cst = arith.constant 5.000000e-01 : f32
    %24 = vector.broadcast %cst : f32 to vector<1x8xf32>
    %25 = arith.mulf %23, %24 : vector<1x8xf32>
    %cst_27 = arith.constant 3.000000e-01 : f32
    %26 = vector.broadcast %cst_27 : f32 to vector<1x8xf32>
    %27 = arith.cmpf ogt, %25, %26 : vector<1x8xf32>
    %cst_28 = arith.constant 9.99999996E-13 : f32
    %28 = vector.broadcast %cst_28 : f32 to vector<1x8xf32>
    %29 = arith.cmpf ogt, %23, %28 : vector<1x8xf32>
    %cst_29 = arith.constant 9.99999996E-13 : f32
    %30 = vector.broadcast %cst_29 : f32 to vector<1x8xf32>
    %31 = arith.maximumf %23, %30 : vector<1x8xf32>
    %cst_30 = arith.constant 1.000000e+00 : f32
    %32 = vector.broadcast %cst_30 : f32 to vector<1x8xf32>
    %33 = arith.divf %32, %31 : vector<1x8xf32>
    %cst_31 = arith.constant 0.000000e+00 : f32
    %34 = vector.broadcast %cst_31 : f32 to vector<1x8xf32>
    %35 = arith.select %29, %33, %34 : vector<1x8xi1>, vector<1x8xf32>
    %36 = arith.mulf %17, %35 : vector<1x8xf32>
    %cst_32 = arith.constant 1.000000e+00 : f32
    %37 = vector.broadcast %cst_32 : f32 to vector<1x8xf32>
    %38 = arith.select %29, %36, %37 : vector<1x8xi1>, vector<1x8xf32>
    %39 = arith.mulf %19, %35 : vector<1x8xf32>
    %cst_33 = arith.constant 0.000000e+00 : f32
    %40 = vector.broadcast %cst_33 : f32 to vector<1x8xf32>
    %41 = arith.select %29, %39, %40 : vector<1x8xi1>, vector<1x8xf32>
    %cst_34 = arith.constant 2.000000e+00 : f32
    %42 = vector.broadcast %cst_34 : f32 to vector<1x8xf32>
    %43 = arith.mulf %42, %35 : vector<1x8xf32>
    %44 = vector.broadcast %14 : vector<1x8xf32> to vector<8x8xf32>
    %45 = arith.subf %0, %44 : vector<8x8xf32>
    %46 = vector.broadcast %15 : vector<1x8xf32> to vector<8x8xf32>
    %47 = arith.subf %1, %46 : vector<8x8xf32>
    %48 = vector.broadcast %38 : vector<1x8xf32> to vector<8x8xf32>
    %49 = arith.mulf %45, %48 : vector<8x8xf32>
    %50 = vector.broadcast %41 : vector<1x8xf32> to vector<8x8xf32>
    %51 = arith.mulf %47, %50 : vector<8x8xf32>
    %52 = arith.addf %49, %51 : vector<8x8xf32>
    %cst_35 = arith.constant 0.000000e+00 : f32
    %53 = vector.broadcast %cst_35 : f32 to vector<8x8xf32>
    %54 = arith.subf %53, %45 : vector<8x8xf32>
    %55 = vector.broadcast %41 : vector<1x8xf32> to vector<8x8xf32>
    %56 = arith.mulf %54, %55 : vector<8x8xf32>
    %57 = vector.broadcast %38 : vector<1x8xf32> to vector<8x8xf32>
    %58 = arith.mulf %47, %57 : vector<8x8xf32>
    %59 = arith.addf %56, %58 : vector<8x8xf32>
    %60 = vector.broadcast %43 : vector<1x8xf32> to vector<8x8xf32>
    %61 = arith.mulf %52, %60 : vector<8x8xf32>
    %cst_36 = arith.constant 0.000000e+00 : f32
    %62 = vector.shape_cast %27 : vector<1x8xi1> to vector<1x8xi1>
    %63 = vector.broadcast %62 : vector<1x8xi1> to vector<8x8xi1>
    %64 = vector.broadcast %cst_36 : f32 to vector<8x8xf32>
    %65 = arith.select %63, %61, %64 : vector<8x8xi1>, vector<8x8xf32>
    %66 = vector.broadcast %43 : vector<1x8xf32> to vector<8x8xf32>
    %67 = arith.mulf %59, %66 : vector<8x8xf32>
    %cst_37 = arith.constant 0.000000e+00 : f32
    %68 = vector.shape_cast %27 : vector<1x8xi1> to vector<1x8xi1>
    %69 = vector.broadcast %68 : vector<1x8xi1> to vector<8x8xi1>
    %70 = vector.broadcast %cst_37 : f32 to vector<8x8xf32>
    %71 = arith.select %69, %67, %70 : vector<8x8xi1>, vector<8x8xf32>
    %cst_38 = arith.constant 0.000000e+00 : f32
    %72 = vector.shape_cast %27 : vector<1x8xi1> to vector<1x8xi1>
    %73 = vector.broadcast %72 : vector<1x8xi1> to vector<8x8xi1>
    %74 = vector.broadcast %cst_38 : f32 to vector<8x8xf32>
    %75 = arith.select %73, %74, %52 : vector<8x8xi1>, vector<8x8xf32>
    %cst_39 = arith.constant 0.000000e+00 : f32
    %76 = vector.shape_cast %27 : vector<1x8xi1> to vector<1x8xi1>
    %77 = vector.broadcast %76 : vector<1x8xi1> to vector<8x8xi1>
    %78 = vector.broadcast %cst_39 : f32 to vector<8x8xf32>
    %79 = arith.select %77, %78, %59 : vector<8x8xi1>, vector<8x8xf32>
    %80 = tpu.concatenate %65, %71, %75, %79 in 0 : vector<8x8xf32>, vector<8x8xf32>, vector<8x8xf32>, vector<8x8xf32> -> vector<32x8xf32>
    %cst_40 = arith.constant dense<0.000000e+00> : vector<6x8xf32>
    %81 = tpu.matmul %3, %80, %cst_40 {dimension_numbers = #tpu.dot_dimension_numbers<[1], [0], [0], [1], [0, 0, 1, 1], [], []>} : vector<6x32xf32>, vector<32x8xf32>, vector<6x8xf32> -> vector<6x8xf32>
    %cst_41 = arith.constant dense<0.000000e+00> : vector<1xf32>
    %82 = vector.multi_reduction <add>, %14, %cst_41 [1] : vector<1x8xf32> to vector<1xf32>
    %83 = vector.shape_cast %82 : vector<1xf32> to vector<1x1xf32>
    %cst_42 = arith.constant 8.000000e+00 : f32
    %84 = vector.broadcast %cst_42 : f32 to vector<1x1xf32>
    %85 = arith.divf %83, %84 : vector<1x1xf32>
    %86 = vector.broadcast %85 : vector<1x1xf32> to vector<1x8xf32>
    %87 = arith.subf %14, %86 : vector<1x8xf32>
    %cst_43 = arith.constant dense<0.000000e+00> : vector<1xf32>
    %88 = vector.multi_reduction <add>, %15, %cst_43 [1] : vector<1x8xf32> to vector<1xf32>
    %89 = vector.shape_cast %88 : vector<1xf32> to vector<1x1xf32>
    %cst_44 = arith.constant 8.000000e+00 : f32
    %90 = vector.broadcast %cst_44 : f32 to vector<1x1xf32>
    %91 = arith.divf %89, %90 : vector<1x1xf32>
    %92 = vector.broadcast %91 : vector<1x1xf32> to vector<1x8xf32>
    %93 = arith.subf %15, %92 : vector<1x8xf32>
    %cst_45 = arith.constant dense<0.000000e+00> : vector<4xf32>
    %94 = vector.multi_reduction <add>, %2, %cst_45 [1] : vector<4x256xf32> to vector<4xf32>
    %95 = vector.shape_cast %94 : vector<4xf32> to vector<4x1xf32>
    %cst_46 = arith.constant 2.560000e+02 : f32
    %96 = vector.broadcast %cst_46 : f32 to vector<4x1xf32>
    %97 = arith.divf %95, %96 : vector<4x1xf32>
    %98 = vector.shape_cast %97 : vector<4x1xf32> to vector<4x1xf32>
    %99 = vector.broadcast %98 : vector<4x1xf32> to vector<4x8xf32>
    %100 = tpu.concatenate %81, %87, %93, %99 in 0 : vector<6x8xf32>, vector<1x8xf32>, vector<1x8xf32>, vector<4x8xf32> -> vector<12x8xf32>
    %cst_47 = arith.constant dense<0.000000e+00> : vector<24x8xf32>
    %101 = tpu.matmul %7, %100, %cst_47 {dimension_numbers = #tpu.dot_dimension_numbers<[1], [0], [0], [1], [0, 0, 1, 1], [], []>} : vector<24x12xf32>, vector<12x8xf32>, vector<24x8xf32> -> vector<24x8xf32>
    %102 = vector.broadcast %8 : vector<24x1xf32> to vector<24x8xf32>
    %103 = arith.addf %101, %102 : vector<24x8xf32>
    %104 = vector.shape_cast %27 : vector<1x8xi1> to vector<1x8xi1>
    %105 = vector.broadcast %104 : vector<1x8xi1> to vector<24x8xi1>
    %106 = vector.shape_cast %5 : vector<24x1xf32> to vector<24x1xf32>
    %107 = vector.broadcast %106 : vector<24x1xf32> to vector<24x8xf32>
    %108 = vector.shape_cast %6 : vector<24x1xf32> to vector<24x1xf32>
    %109 = vector.broadcast %108 : vector<24x1xf32> to vector<24x8xf32>
    %110 = arith.select %105, %107, %109 : vector<24x8xi1>, vector<24x8xf32>
    %111 = arith.addf %103, %110 : vector<24x8xf32>
    %cst_48 = arith.constant 0.000000e+00 : f32
    %112 = vector.shape_cast %27 : vector<1x8xi1> to vector<1x8xi1>
    %113 = vector.broadcast %112 : vector<1x8xi1> to vector<24x8xi1>
    %114 = vector.broadcast %cst_48 : f32 to vector<24x8xf32>
    %115 = arith.select %113, %111, %114 : vector<24x8xi1>, vector<24x8xf32>
    %cst_49 = arith.constant 0.000000e+00 : f32
    %116 = vector.shape_cast %27 : vector<1x8xi1> to vector<1x8xi1>
    %117 = vector.broadcast %116 : vector<1x8xi1> to vector<24x8xi1>
    %118 = vector.broadcast %cst_49 : f32 to vector<24x8xf32>
    %119 = arith.select %117, %118, %111 : vector<24x8xi1>, vector<24x8xf32>
    %120 = tpu.concatenate %115, %119 in 0 : vector<24x8xf32>, vector<24x8xf32> -> vector<48x8xf32>
    %cst_50 = arith.constant dense<0.000000e+00> : vector<96x8xf32>
    %121 = tpu.matmul %4, %120, %cst_50 {dimension_numbers = #tpu.dot_dimension_numbers<[1], [0], [0], [1], [0, 0, 1, 1], [], []>} : vector<96x48xf32>, vector<48x8xf32>, vector<96x8xf32> -> vector<96x8xf32>
    %122 = vector.extract_strided_slice %121 {offsets = [0, 0], sizes = [48, 8], strides = [1, 1]} : vector<96x8xf32> to vector<48x8xf32>
    %123 = vector.extract_strided_slice %121 {offsets = [48, 0], sizes = [48, 8], strides = [1, 1]} : vector<96x8xf32> to vector<48x8xf32>
    %cst_51 = arith.constant 5.000000e-01 : f32
    %124 = vector.broadcast %cst_51 : f32 to vector<1x8xf32>
    %125 = arith.mulf %23, %124 : vector<1x8xf32>
    %cst_52 = arith.constant 1.000000e+00 : f32
    %126 = vector.broadcast %cst_52 : f32 to vector<1x8xf32>
    %127 = arith.select %27, %125, %126 : vector<1x8xi1>, vector<1x8xf32>
    %128 = vector.broadcast %127 : vector<1x8xf32> to vector<48x8xf32>
    %129 = arith.mulf %122, %128 : vector<48x8xf32>
    %130 = vector.broadcast %127 : vector<1x8xf32> to vector<48x8xf32>
    %131 = arith.mulf %123, %130 : vector<48x8xf32>
    %132 = vector.broadcast %38 : vector<1x8xf32> to vector<48x8xf32>
    %133 = arith.mulf %129, %132 : vector<48x8xf32>
    %134 = vector.broadcast %41 : vector<1x8xf32> to vector<48x8xf32>
    %135 = arith.mulf %131, %134 : vector<48x8xf32>
    %136 = arith.subf %133, %135 : vector<48x8xf32>
    %137 = vector.broadcast %14 : vector<1x8xf32> to vector<48x8xf32>
    %138 = arith.addf %136, %137 : vector<48x8xf32>
    %139 = vector.broadcast %41 : vector<1x8xf32> to vector<48x8xf32>
    %140 = arith.mulf %129, %139 : vector<48x8xf32>
    %141 = vector.broadcast %38 : vector<1x8xf32> to vector<48x8xf32>
    %142 = arith.mulf %131, %141 : vector<48x8xf32>
    %143 = arith.addf %140, %142 : vector<48x8xf32>
    %144 = vector.broadcast %15 : vector<1x8xf32> to vector<48x8xf32>
    %145 = arith.addf %143, %144 : vector<48x8xf32>
    %146 = tpu.concatenate %138, %145 in 0 : vector<48x8xf32>, vector<48x8xf32> -> vector<96x8xf32>
    %147 = vector.broadcast %14 : vector<1x8xf32> to vector<12x8xf32>
    %148 = arith.subf %9, %147 : vector<12x8xf32>
    %149 = vector.broadcast %15 : vector<1x8xf32> to vector<12x8xf32>
    %150 = arith.subf %10, %149 : vector<12x8xf32>
    %151 = vector.broadcast %38 : vector<1x8xf32> to vector<12x8xf32>
    %152 = arith.mulf %148, %151 : vector<12x8xf32>
    %153 = vector.broadcast %41 : vector<1x8xf32> to vector<12x8xf32>
    %154 = arith.mulf %150, %153 : vector<12x8xf32>
    %155 = arith.addf %152, %154 : vector<12x8xf32>
    %cst_53 = arith.constant 0.000000e+00 : f32
    %156 = vector.broadcast %cst_53 : f32 to vector<12x8xf32>
    %157 = arith.subf %156, %148 : vector<12x8xf32>
    %158 = vector.broadcast %41 : vector<1x8xf32> to vector<12x8xf32>
    %159 = arith.mulf %157, %158 : vector<12x8xf32>
    %160 = vector.broadcast %38 : vector<1x8xf32> to vector<12x8xf32>
    %161 = arith.mulf %150, %160 : vector<12x8xf32>
    %162 = arith.addf %159, %161 : vector<12x8xf32>
    %163 = vector.broadcast %43 : vector<1x8xf32> to vector<12x8xf32>
    %164 = arith.mulf %155, %163 : vector<12x8xf32>
    %cst_54 = arith.constant 0.000000e+00 : f32
    %165 = vector.shape_cast %27 : vector<1x8xi1> to vector<1x8xi1>
    %166 = vector.broadcast %165 : vector<1x8xi1> to vector<12x8xi1>
    %167 = vector.broadcast %cst_54 : f32 to vector<12x8xf32>
    %168 = arith.select %166, %164, %167 : vector<12x8xi1>, vector<12x8xf32>
    %169 = vector.broadcast %43 : vector<1x8xf32> to vector<12x8xf32>
    %170 = arith.mulf %162, %169 : vector<12x8xf32>
    %cst_55 = arith.constant 0.000000e+00 : f32
    %171 = vector.shape_cast %27 : vector<1x8xi1> to vector<1x8xi1>
    %172 = vector.broadcast %171 : vector<1x8xi1> to vector<12x8xi1>
    %173 = vector.broadcast %cst_55 : f32 to vector<12x8xf32>
    %174 = arith.select %172, %170, %173 : vector<12x8xi1>, vector<12x8xf32>
    %cst_56 = arith.constant 0.000000e+00 : f32
    %175 = vector.shape_cast %27 : vector<1x8xi1> to vector<1x8xi1>
    %176 = vector.broadcast %175 : vector<1x8xi1> to vector<12x8xi1>
    %177 = vector.broadcast %cst_56 : f32 to vector<12x8xf32>
    %178 = arith.select %176, %177, %155 : vector<12x8xi1>, vector<12x8xf32>
    %cst_57 = arith.constant 0.000000e+00 : f32
    %179 = vector.shape_cast %27 : vector<1x8xi1> to vector<1x8xi1>
    %180 = vector.broadcast %179 : vector<1x8xi1> to vector<12x8xi1>
    %181 = vector.broadcast %cst_57 : f32 to vector<12x8xf32>
    %182 = arith.select %180, %181, %162 : vector<12x8xi1>, vector<12x8xf32>
    %183 = tpu.concatenate %168, %174, %178, %182 in 0 : vector<12x8xf32>, vector<12x8xf32>, vector<12x8xf32>, vector<12x8xf32> -> vector<48x8xf32>
    %cst_58 = arith.constant dense<0.000000e+00> : vector<6x8xf32>
    %184 = tpu.matmul %11, %183, %cst_58 {dimension_numbers = #tpu.dot_dimension_numbers<[1], [0], [0], [1], [0, 0, 1, 1], [], []>} : vector<6x48xf32>, vector<48x8xf32>, vector<6x8xf32> -> vector<6x8xf32>
    %185 = tpu.concatenate %184, %184, %184, %184 in 0 : vector<6x8xf32>, vector<6x8xf32>, vector<6x8xf32>, vector<6x8xf32> -> vector<24x8xf32>
    %186 = arith.subf %111, %185 : vector<24x8xf32>
    %187 = arith.mulf %186, %186 : vector<24x8xf32>
    %cst_59 = arith.constant dense<0.000000e+00> : vector<4x8xf32>
    %188 = tpu.matmul %12, %187, %cst_59 {dimension_numbers = #tpu.dot_dimension_numbers<[1], [0], [0], [1], [0, 0, 1, 1], [], []>} : vector<4x24xf32>, vector<24x8xf32>, vector<4x8xf32> -> vector<4x8xf32>
    %189 = math.sqrt %188 : vector<4x8xf32>
    %cst_60 = arith.constant dense<0x7F800000> : vector<8xf32>
    %190 = vector.multi_reduction <minimumf>, %189, %cst_60 [0] : vector<4x8xf32> to vector<8xf32>
    %191 = vector.shape_cast %190 : vector<8xf32> to vector<1x8xf32>
    %cst_61 = arith.constant dense<0.000000e+00> : vector<1xf32>
    %192 = vector.multi_reduction <add>, %191, %cst_61 [1] : vector<1x8xf32> to vector<1xf32>
    %193 = vector.shape_cast %192 : vector<1xf32> to vector<1x1xf32>
    %cst_62 = arith.constant 8.000000e+00 : f32
    %194 = vector.broadcast %cst_62 : f32 to vector<1x1xf32>
    %195 = arith.divf %193, %194 : vector<1x1xf32>
    %196 = tpu.concatenate %9, %9, %9, %9 in 0 : vector<12x8xf32>, vector<12x8xf32>, vector<12x8xf32>, vector<12x8xf32> -> vector<48x8xf32>
    %197 = arith.subf %138, %196 : vector<48x8xf32>
    %198 = tpu.concatenate %10, %10, %10, %10 in 0 : vector<12x8xf32>, vector<12x8xf32>, vector<12x8xf32>, vector<12x8xf32> -> vector<48x8xf32>
    %199 = arith.subf %145, %198 : vector<48x8xf32>
    %200 = arith.mulf %197, %197 : vector<48x8xf32>
    %201 = arith.mulf %199, %199 : vector<48x8xf32>
    %202 = arith.addf %200, %201 : vector<48x8xf32>
    %203 = math.sqrt %202 : vector<48x8xf32>
    %cst_63 = arith.constant dense<0.000000e+00> : vector<8x8xf32>
    %204 = tpu.matmul %13, %203, %cst_63 {dimension_numbers = #tpu.dot_dimension_numbers<[1], [0], [0], [1], [0, 0, 1, 1], [], []>} : vector<8x48xf32>, vector<48x8xf32>, vector<8x8xf32> -> vector<8x8xf32>
    %205 = vector.extract_strided_slice %204 {offsets = [0, 0], sizes = [4, 8], strides = [1, 1]} : vector<8x8xf32> to vector<4x8xf32>
    %cst_64 = arith.constant dense<0x7F800000> : vector<8xf32>
    %206 = vector.multi_reduction <minimumf>, %205, %cst_64 [0] : vector<4x8xf32> to vector<8xf32>
    %207 = vector.shape_cast %206 : vector<8xf32> to vector<1x8xf32>
    %cst_65 = arith.constant dense<0.000000e+00> : vector<1xf32>
    %208 = vector.multi_reduction <add>, %207, %cst_65 [1] : vector<1x8xf32> to vector<1xf32>
    %209 = vector.shape_cast %208 : vector<1xf32> to vector<1x1xf32>
    %cst_66 = arith.constant 8.000000e+00 : f32
    %210 = vector.broadcast %cst_66 : f32 to vector<1x1xf32>
    %211 = arith.divf %209, %210 : vector<1x1xf32>
    %212 = vector.extract_strided_slice %204 {offsets = [4, 0], sizes = [4, 8], strides = [1, 1]} : vector<8x8xf32> to vector<4x8xf32>
    %cst_67 = arith.constant dense<0x7F800000> : vector<8xf32>
    %213 = vector.multi_reduction <minimumf>, %212, %cst_67 [0] : vector<4x8xf32> to vector<8xf32>
    %214 = vector.shape_cast %213 : vector<8xf32> to vector<1x8xf32>
    %cst_68 = arith.constant dense<0.000000e+00> : vector<1xf32>
    %215 = vector.multi_reduction <add>, %214, %cst_68 [1] : vector<1x8xf32> to vector<1xf32>
    %216 = vector.shape_cast %215 : vector<1xf32> to vector<1x1xf32>
    %cst_69 = arith.constant 8.000000e+00 : f32
    %217 = vector.broadcast %cst_69 : f32 to vector<1x1xf32>
    %218 = arith.divf %216, %217 : vector<1x1xf32>
    %cst_70 = arith.constant 0.000000e+00 : f32
    %219 = vector.broadcast %cst_70 : f32 to vector<1x1xf32>
    %220 = tpu.concatenate %195, %211, %218, %219 in 0 : vector<1x1xf32>, vector<1x1xf32>, vector<1x1xf32>, vector<1x1xf32> -> vector<4x1xf32>
    %c0_71 = arith.constant 0 : index
    %c0_72 = arith.constant 0 : index
    %221 = vector.load %arg14[%c0_71, %c0_72] : memref<96x8xf32, #tpu.memory_space<vmem>>, vector<96x8xf32>
    tpu.vector_store %arg14[%c0_71, %c0_72], %146 {strides = array<i32>} : memref<96x8xf32, #tpu.memory_space<vmem>>, vector<96x8xf32>,
    %c0_73 = arith.constant 0 : index
    %c0_74 = arith.constant 0 : index
    %222 = vector.load %arg15[%c0_73, %c0_74] : memref<4x1xf32, #tpu.memory_space<vmem>>, vector<4x1xf32>
    tpu.vector_store %arg15[%c0_73, %c0_74], %220 {strides = array<i32>} : memref<4x1xf32, #tpu.memory_space<vmem>>, vector<4x1xf32>,
    return
  }
}

</mosaic_0001>

<llo_original>
// kernel: eigentrajectory_forward.1
$region0: #{eigentrajectory_forward.1}
  #allocation0 [shape = 'u32[]', space=smem, size = 0x4, offset = 0x4, fixed_abs, tag = 'smem constant byte address 0x4 - core index']
  #allocation1 [shape = 'u32[144,128]{1,0:T(1,128)}', space=vmem, size = 0x12000, scoped, tag = 'internal scratch']
  %s0 = inlined_call_operand.vmem [shape: f32[8,8], index: 0, kind: input, shape index: {}]
  %s1 = inlined_call_operand.vmem [shape: f32[8,8], index: 1, kind: input, shape index: {}]
  %s2 = inlined_call_operand.vmem [shape: f32[12,8], index: 2, kind: input, shape index: {}]
  %s3 = inlined_call_operand.vmem [shape: f32[12,8], index: 3, kind: input, shape index: {}]
  %s4 = inlined_call_operand.vmem [shape: f32[4,256], index: 4, kind: input, shape index: {}]
  %s5 = inlined_call_operand.vmem [shape: f32[6,32], index: 5, kind: input, shape index: {}]
  %s6 = inlined_call_operand.vmem [shape: f32[6,48], index: 6, kind: input, shape index: {}]
  %s7 = inlined_call_operand.vmem [shape: f32[96,48], index: 7, kind: input, shape index: {}]
  %s8 = inlined_call_operand.vmem [shape: f32[24,1], index: 8, kind: input, shape index: {}]
  %s9 = inlined_call_operand.vmem [shape: f32[24,1], index: 9, kind: input, shape index: {}]
  %s10 = inlined_call_operand.vmem [shape: f32[24,12], index: 10, kind: input, shape index: {}]
  %s11 = inlined_call_operand.vmem [shape: f32[24,1], index: 11, kind: input, shape index: {}]
  %s12 = inlined_call_operand.vmem [shape: f32[4,24], index: 12, kind: input, shape index: {}]
  %s13 = inlined_call_operand.vmem [shape: f32[8,48], index: 13, kind: input, shape index: {}]
  %s14 = inlined_call_operand.vmem [shape: f32[96,8], index: 14, kind: output, shape index: {0}]
  %s15 = inlined_call_operand.vmem [shape: f32[4,1], index: 15, kind: output, shape index: {1}]
  %16 = xla_tuple %s14, %s15
  %s17 = sld [smem:[#allocation0]]
  $region74: #{eigentrajectory_forward.1} parent=0
    _
  %s19 = ssub.s32 1, %s17
  %s20 = scalar_select 0, %s19, %s17
  // Predicated region
  $region2: #{eigentrajectory_forward.1} parent=0 // pred_check
    _
  $region3: #{eigentrajectory_forward.1} parent=0 // pred_check_branch
    %22 = sbr.rel (0) target = $region5
  $region4: #{eigentrajectory_forward.1} parent=0 // pred_region
    _
  $region5: #{eigentrajectory_forward.1} parent=0 // pred_fallthru
    _
  // Predicated region
  $region6: #{eigentrajectory_forward.1} parent=0 // pred_check
    _
  $region7: #{eigentrajectory_forward.1} parent=0 // pred_check_branch
    %24 = sbr.rel (0) target = $region9
  $region8: #{eigentrajectory_forward.1} parent=0 // pred_region
    _
  $region9: #{eigentrajectory_forward.1} parent=0 // pred_fallthru
    _
  // Predicated region
  $region10: #{eigentrajectory_forward.1} parent=0 // pred_check
    _
  $region11: #{eigentrajectory_forward.1} parent=0 // pred_check_branch
    %26 = sbr.rel (0) target = $region13
  $region12: #{eigentrajectory_forward.1} parent=0 // pred_region
    _
  $region13: #{eigentrajectory_forward.1} parent=0 // pred_fallthru
    _
  // Predicated region
  $region14: #{eigentrajectory_forward.1} parent=0 // pred_check
    _
  $region15: #{eigentrajectory_forward.1} parent=0 // pred_check_branch
    %28 = sbr.rel (0) target = $region17
  $region16: #{eigentrajectory_forward.1} parent=0 // pred_region
    _
  $region17: #{eigentrajectory_forward.1} parent=0 // pred_fallthru
    _
  // Predicated region
  $region18: #{eigentrajectory_forward.1} parent=0 // pred_check
    _
  $region19: #{eigentrajectory_forward.1} parent=0 // pred_check_branch
    %30 = sbr.rel (0) target = $region21
  $region20: #{eigentrajectory_forward.1} parent=0 // pred_region
    _
  $region21: #{eigentrajectory_forward.1} parent=0 // pred_fallthru
    _
  // Predicated region
  $region22: #{eigentrajectory_forward.1} parent=0 // pred_check
    _
  $region23: #{eigentrajectory_forward.1} parent=0 // pred_check_branch
    %32 = sbr.rel (0) target = $region25
  $region24: #{eigentrajectory_forward.1} parent=0 // pred_region
    _
  $region25: #{eigentrajectory_forward.1} parent=0 // pred_fallthru
    _
  // Predicated region
  $region26: #{eigentrajectory_forward.1} parent=0 // pred_check
    _
  $region27: #{eigentrajectory_forward.1} parent=0 // pred_check_branch
    %34 = sbr.rel (0) target = $region29
  $region28: #{eigentrajectory_forward.1} parent=0 // pred_region
    _
  $region29: #{eigentrajectory_forward.1} parent=0 // pred_fallthru
    _
  // Predicated region
  $region30: #{eigentrajectory_forward.1} parent=0 // pred_check
    _
  $region31: #{eigentrajectory_forward.1} parent=0 // pred_check_branch
    %36 = sbr.rel (0) target = $region33
  $region32: #{eigentrajectory_forward.1} parent=0 // pred_region
    _
  $region33: #{eigentrajectory_forward.1} parent=0 // pred_fallthru
    _
  // Predicated region
  $region34: #{eigentrajectory_forward.1} parent=0 // pred_check
    _
  $region35: #{eigentrajectory_forward.1} parent=0 // pred_check_branch
    %38 = sbr.rel (0) target = $region37
  $region36: #{eigentrajectory_forward.1} parent=0 // pred_region
    _
  $region37: #{eigentrajectory_forward.1} parent=0 // pred_fallthru
    _
  // Predicated region
  $region38: #{eigentrajectory_forward.1} parent=0 // pred_check
    _
  $region39: #{eigentrajectory_forward.1} parent=0 // pred_check_branch
    %40 = sbr.rel (0) target = $region41
  $region40: #{eigentrajectory_forward.1} parent=0 // pred_region
    _
  $region41: #{eigentrajectory_forward.1} parent=0 // pred_fallthru
    _
  // Predicated region
  $region42: #{eigentrajectory_forward.1} parent=0 // pred_check
    _
  $region43: #{eigentrajectory_forward.1} parent=0 // pred_check_branch
    %42 = sbr.rel (0) target = $region45
  $region44: #{eigentrajectory_forward.1} parent=0 // pred_region
    _
  $region45: #{eigentrajectory_forward.1} parent=0 // pred_fallthru
    _
  // Predicated region
  $region46: #{eigentrajectory_forward.1} parent=0 // pred_check
    _
  $region47: #{eigentrajectory_forward.1} parent=0 // pred_check_branch
    %44 = sbr.rel (0) target = $region49
  $region48: #{eigentrajectory_forward.1} parent=0 // pred_region
    _
  $region49: #{eigentrajectory_forward.1} parent=0 // pred_fallthru
    _
  // Predicated region
  $region50: #{eigentrajectory_forward.1} parent=0 // pred_check
    _
  $region51: #{eigentrajectory_forward.1} parent=0 // pred_check_branch
    %46 = sbr.rel (0) target = $region53
  $region52: #{eigentrajectory_forward.1} parent=0 // pred_region
    _
  $region53: #{eigentrajectory_forward.1} parent=0 // pred_fallthru
    _
  // Predicated region
  $region54: #{eigentrajectory_forward.1} parent=0 // pred_check
    _
  $region55: #{eigentrajectory_forward.1} parent=0 // pred_check_branch
    %48 = sbr.rel (0) target = $region57
  $region56: #{eigentrajectory_forward.1} parent=0 // pred_region
    _
  $region57: #{eigentrajectory_forward.1} parent=0 // pred_fallthru
    _
  %v49 = vld [vmem:[%s0] sm:$0xff]
  %v50 = vld [vmem:[%s1] sm:$0xff]
  %v51 = vld [vmem:[%s4] sm:$0xff]
  %v52 = vld [vmem:[%s5] sm:$0x3f]
  %v53 = vld [vmem:[%s7] sm:$0xff]
  %v54 = vld [vmem:[%s7 + $0x8] sm:$0xff]
  %v55 = vld [vmem:[%s7 + $0x10] sm:$0xff]
  %v56 = vld [vmem:[%s7 + $0x18] sm:$0xff]
  %v57 = vld [vmem:[%s7 + $0x20] sm:$0xff]
  %v58 = vld [vmem:[%s7 + $0x28] sm:$0xff]
  %v59 = vld [vmem:[%s7 + $0x30] sm:$0xff]
  %v60 = vld [vmem:[%s7 + $0x38] sm:$0xff]
  %v61 = vld [vmem:[%s7 + $0x40] sm:$0xff]
  %v62 = vld [vmem:[%s7 + $0x48] sm:$0xff]
  %v63 = vld [vmem:[%s7 + $0x50] sm:$0xff]
  %v64 = vld [vmem:[%s7 + $0x58] sm:$0xff]
  %v65 = vld [vmem:[%s8] sm:$0xff]
  %v66 = vld [vmem:[%s8 + $0x8] sm:$0xff]
  %v67 = vld [vmem:[%s8 + $0x10] sm:$0xff]
  %v68 = vld [vmem:[%s9] sm:$0xff]
  %v69 = vld [vmem:[%s9 + $0x8] sm:$0xff]
  %v70 = vld [vmem:[%s9 + $0x10] sm:$0xff]
  %v71 = vld [vmem:[%s10] sm:$0xff]
  %v72 = vld [vmem:[%s10 + $0x8] sm:$0xff]
  %v73 = vld [vmem:[%s10 + $0x10] sm:$0xff]
  %v74 = vld [vmem:[%s11] sm:$0xff]
  %v75 = vld [vmem:[%s11 + $0x8] sm:$0xff]
  %v76 = vld [vmem:[%s11 + $0x10] sm:$0xff]
  %v77 = vld [vmem:[%s2] sm:$0xff]
  %v78 = vld [vmem:[%s2 + $0x8] sm:$0xf]
  %v79 = vld [vmem:[%s3] sm:$0xff]
  %v80 = vld [vmem:[%s3 + $0x8] sm:$0xf]
  %v81 = vld [vmem:[%s6] sm:$0x3f]
  %v82 = vld [vmem:[%s12] sm:$0xf]
  %v83 = vld [vmem:[%s13] sm:$0xff]
  %v85 = vrot.slane %v49, 6
  %v87 = vsub.f32 %v49, %v85
  %v89 = vrot.slane %v50, 6
  %v91 = vsub.f32 %v50, %v89
  %v92 = vmul.f32 %v87, %v87
  %v93 = vmul.f32 %v91, %v91
  %v94 = vadd.f32 %v92, %v93
  %v95 = vrsqrt.pop %v94
  %v96 = vmul.f32 %v94, %v95
  %vm97 = vcmp.eq.f32.partialorder %v94, inf
  %v98 = vsel %vm97, %v94, %v96
  %vm99 = vcmp.eq.f32.partialorder %v94, 0.0
  %v100 = vand.u32 %v94, 2147483648
  %v101 = vsel %vm99, %v100, %v98
  %v102 = vmul.f32 %v101, 0.5
  %vm103 = vcmp.gt.f32.partialorder %v102, 0.3
  %vm104 = vcmp.gt.f32.partialorder %v101, 1e-12
  %v105 = vmax.f32 %v101, 1e-12
  %v106 = vrcp.pop %v105
  %v107 = vmul.f32 1.0, %v106
  %v108 = vsel %vm104, %v107, 0.0
  %v109 = vmul.f32 %v87, %v108
  %v110 = vsel %vm104, %v109, 1.0
  %v111 = vmul.f32 %v91, %v108
  %v112 = vsel %vm104, %v111, 0.0
  %v113 = vmul.f32 %v108, 2.0
  %v114 = vlaneseq
  %v115 = vshrl.u32 %v114, 7
  %v116 = vsub.s32 7, %v115
  %v117 = vrot.slane %v49, %v116
  %v118 = vsub.f32 %v49, %v117
  %v119 = vlaneseq
  %v120 = vshrl.u32 %v119, 7
  %v121 = vsub.s32 7, %v120
  %v122 = vrot.slane %v50, %v121
  %v123 = vsub.f32 %v50, %v122
  %v124 = vlaneseq
  %v125 = vshrl.u32 %v124, 7
  %v126 = vsub.s32 7, %v125
  %v127 = vrot.slane %v110, %v126
  %v128 = vmul.f32 %v118, %v127
  %v129 = vlaneseq
  %v130 = vshrl.u32 %v129, 7
  %v131 = vsub.s32 7, %v130
  %v132 = vrot.slane %v112, %v131
  %v133 = vmul.f32 %v123, %v132
  %v134 = vadd.f32 %v128, %v133
  %v135 = vsub.f32 0.0, %v118
  %v136 = vmul.f32 %v135, %v132
  %v137 = vmul.f32 %v123, %v127
  %v138 = vadd.f32 %v136, %v137
  %v139 = vlaneseq
  %v140 = vshrl.u32 %v139, 7
  %v141 = vsub.s32 7, %v140
  %v142 = vrot.slane %v113, %v141
  %v143 = vmul.f32 %v134, %v142
  %v144 = vsel %vm103, 1, 0
  %v145 = vlaneseq
  %v146 = vshrl.u32 %v145, 7
  %v147 = vsub.s32 7, %v146
  %v148 = vrot.slane %v144, %v147
  %vm149 = vcmp.eq.s32.totalorder %v148, 1
  %v150 = vsel %vm149, %v143, 0.0
  %v151 = vmul.f32 %v138, %v142
  %v152 = vsel %vm149, %v151, 0.0
  %v153 = vsel %vm149, 0.0, %v134
  %v154 = vsel %vm149, 0.0, %v138
  %vm155 = vcmask 261120
  %v157 = vsel %vm155, %v52, 0
  %159 = vmatprep.subr.mxu0 0.0
  %160 = vmatpush1.msra.mxu0 0.0
  %161 = vmatprep.subr.mxu0 0.0
  %162 = vmatpush1.msra.mxu0 0.0
  %163 = vmatprep.subr.mxu0 0.0
  %164 = vmatpush1.msra.mxu0 0.0
  %165 = vmatprep.subr.mxu0 0.0
  %166 = vmatpush1.msra.mxu0 0.0
  %167 = vmatprep.subr.mxu0 0.0
  %168 = vmatpush1.msra.mxu0 0.0
  %169 = vmatprep.subr.mxu0 0.0
  %170 = vmatpush1.msra.mxu0 0.0
  %171 = vmatprep.subr.mxu0 0.0
  %172 = vmatpush1.msra.mxu0 0.0
  %173 = vmatprep.subr.mxu0 0.0
  %174 = vmatpush1.msra.mxu0 0.0
  %175 = vmatprep.subr.mxu0 0.0
  %176 = vmatpush1.msra.mxu0 0.0
  %177 = vmatprep.subr.mxu0 0.0
  %178 = vmatpush1.msra.mxu0 0.0
  %179 = vmatprep.subr.mxu0 0.0
  %180 = vmatpush1.msra.mxu0 0.0
  %181 = vmatprep.subr.mxu0 0.0
  %182 = vmatpush1.msra.mxu0 0.0
  %183 = vmatprep.subr.mxu0 0.0
  %184 = vmatpush1.msra.mxu0 %v154
  %185 = vmatprep.subr.mxu0 0.0
  %186 = vmatpush1.msra.mxu0 %v153
  %187 = vmatprep.subr.mxu0 0.0
  %188 = vmatpush1.msra.mxu0 %v152
  %189 = vmatprep.subr.mxu0 0.0
  %190 = vmatpush1.msra.mxu0 %v150
  %191 = vmatprep.subr.mxu0 0.0
  %192 = vmatpush2.msra.mxu0 0.0
  %193 = vmatprep.subr.mxu0 0.0
  %194 = vmatpush2.msra.mxu0 0.0
  %195 = vmatprep.subr.mxu0 0.0
  %196 = vmatpush2.msra.mxu0 0.0
  %197 = vmatprep.subr.mxu0 0.0
  %198 = vmatpush2.msra.mxu0 0.0
  %199 = vmatprep.subr.mxu0 0.0
  %200 = vmatpush2.msra.mxu0 0.0
  %201 = vmatprep.subr.mxu0 0.0
  %202 = vmatpush2.msra.mxu0 0.0
  %203 = vmatprep.subr.mxu0 0.0
  %204 = vmatpush2.msra.mxu0 0.0
  %205 = vmatprep.subr.mxu0 0.0
  %206 = vmatpush2.msra.mxu0 0.0
  %207 = vmatprep.subr.mxu0 0.0
  %208 = vmatpush2.msra.mxu0 0.0
  %209 = vmatprep.subr.mxu0 0.0
  %210 = vmatpush2.msra.mxu0 0.0
  %211 = vmatprep.subr.mxu0 0.0
  %212 = vmatpush2.msra.mxu0 0.0
  %213 = vmatprep.subr.mxu0 0.0
  %214 = vmatpush2.msra.mxu0 0.0
  %215 = vmatprep.subr.mxu0 0.0
  %216 = vmatpush2.msra.mxu0 0.0
  %217 = vmatprep.subr.mxu0 0.0
  %218 = vmatpush2.msra.mxu0 0.0
  %219 = vmatprep.subr.mxu0 0.0
  %220 = vmatpush2.msra.mxu0 0.0
  %221 = vmatprep.subr.mxu0 0.0
  %222 = vmatpush2.msra.mxu0 0.0
  %223 = vmatprep.mubr.f32.mxu0 0.0
  %224 = vmatmul.mubr.f32.gmra.mxu0 %v157
  %v225 = vpop.f32.mrf.mxu0
  %v226 = vadd.f32 0.0, %v225
  %v227 = vpop.f32.mrf.mxu0
  %228 = vdwg.mxu0
  %vm229 = vcmask 64519
  %v230 = vsel %vm229, %v49, 0.0
  %231 = vadd.xlane.f32.xlu0 %v230
  %v232 = vpop.xlane.xlu0 %231
  %v233 = vrcp.pop 8.0
  %v234 = vmul.f32 %v232, %v233
  %v235 = vsub.f32 %v49, %v234
  %v236 = vsel %vm229, %v50, 0.0
  %237 = vadd.xlane.f32.xlu0 %v236
  %v238 = vpop.xlane.xlu0 %237
  %v239 = vmul.f32 %v238, %v233
  %v240 = vsub.f32 %v50, %v239
  %v242 = vcombine.high %v51, %v51
  %vm244 = vcmask 1043456
  %v245 = vsel %vm244, %v51, 0.0
  %v246 = vsel %vm244, %v242, 0.0
  %v247 = vadd.f32 %v245, %v246
  %248 = vadd.xlane.f32.xlu0 %v247
  %v249 = vpop.xlane.xlu0 %248
  %v250 = vrcp.pop 256.0
  %v251 = vmul.f32 %v249, %v250
  %v253 = vrot.slane %v235, 1
  %vm255 = vcmask 1045504
  %v256 = vsel %vm255, %v226, %v253
  %vm257 = vcmask 1046528
  %v258 = vsel %vm257, %v256, %v240
  %260 = vset.pattern.permute.xlu0 0
  %261 = vperm.xlu0 %260, %v74
  %v262 = vpop.permute.xlu0 %261
  %265 = vset.pattern.permute.xlu0 0
  %266 = vperm.xlu0 %265, %v75
  %v267 = vpop.permute.xlu0 %266
  %270 = vset.pattern.permute.xlu0 0
  %271 = vperm.xlu0 %270, %v76
  %v272 = vpop.permute.xlu0 %271
  %vm274 = vcmask 97280
  %v276 = vsel %vm274, %v71, 0
  %v279 = vsel %vm274, %v72, 0
  %v282 = vsel %vm274, %v73, 0
  %v285 = vsel %vm244, %v251, 0
  %287 = vmatprep.subr.mxu0 0.0
  %288 = vmatpush1.msra.mxu0 0.0
  %289 = vmatprep.subr.mxu0 0.0
  %290 = vmatpush1.msra.mxu0 0.0
  %291 = vmatprep.subr.mxu0 0.0
  %292 = vmatpush1.msra.mxu0 0.0
  %293 = vmatprep.subr.mxu0 0.0
  %294 = vmatpush1.msra.mxu0 0.0
  %295 = vmatprep.subr.mxu0 0.0
  %296 = vmatpush1.msra.mxu0 0.0
  %297 = vmatprep.subr.mxu0 0.0
  %298 = vmatpush1.msra.mxu0 0.0
  %299 = vmatprep.subr.mxu0 0.0
  %300 = vmatpush1.msra.mxu0 0.0
  %301 = vmatprep.subr.mxu0 0.0
  %302 = vmatpush1.msra.mxu0 0.0
  %303 = vmatprep.subr.mxu0 0.0
  %304 = vmatpush1.msra.mxu0 0.0
  %305 = vmatprep.subr.mxu0 0.0
  %306 = vmatpush1.msra.mxu0 0.0
  %307 = vmatprep.subr.mxu0 0.0
  %308 = vmatpush1.msra.mxu0 0.0
  %309 = vmatprep.subr.mxu0 0.0
  %310 = vmatpush1.msra.mxu0 0.0
  %311 = vmatprep.subr.mxu0 0.0
  %312 = vmatpush1.msra.mxu0 0.0
  %313 = vmatprep.subr.mxu0 0.0
  %314 = vmatpush1.msra.mxu0 0.0
  %315 = vmatprep.subr.mxu0 0.0
  %316 = vmatpush1.msra.mxu0 %v285
  %317 = vmatprep.subr.mxu0 0.0
  %318 = vmatpush1.msra.mxu0 %v258
  %319 = vmatprep.subr.mxu0 0.0
  %320 = vmatpush2.msra.mxu0 0.0
  %321 = vmatprep.subr.mxu0 0.0
  %322 = vmatpush2.msra.mxu0 0.0
  %323 = vmatprep.subr.mxu0 0.0
  %324 = vmatpush2.msra.mxu0 0.0
  %325 = vmatprep.subr.mxu0 0.0
  %326 = vmatpush2.msra.mxu0 0.0
  %327 = vmatprep.subr.mxu0 0.0
  %328 = vmatpush2.msra.mxu0 0.0
  %329 = vmatprep.subr.mxu0 0.0
  %330 = vmatpush2.msra.mxu0 0.0
  %331 = vmatprep.subr.mxu0 0.0
  %332 = vmatpush2.msra.mxu0 0.0
  %333 = vmatprep.subr.mxu0 0.0
  %334 = vmatpush2.msra.mxu0 0.0
  %335 = vmatprep.subr.mxu0 0.0
  %336 = vmatpush2.msra.mxu0 0.0
  %337 = vmatprep.subr.mxu0 0.0
  %338 = vmatpush2.msra.mxu0 0.0
  %339 = vmatprep.subr.mxu0 0.0
  %340 = vmatpush2.msra.mxu0 0.0
  %341 = vmatprep.subr.mxu0 0.0
  %342 = vmatpush2.msra.mxu0 0.0
  %343 = vmatprep.subr.mxu0 0.0
  %344 = vmatpush2.msra.mxu0 0.0
  %345 = vmatprep.subr.mxu0 0.0
  %346 = vmatpush2.msra.mxu0 0.0
  %347 = vmatprep.subr.mxu0 0.0
  %348 = vmatpush2.msra.mxu0 0.0
  %349 = vmatprep.subr.mxu0 0.0
  %350 = vmatpush2.msra.mxu0 0.0
  %351 = vmatprep.mubr.f32.mxu0 0.0
  %352 = vmatmul.mubr.f32.gmra.mxu0 %v276
  %v353 = vpop.f32.mrf.mxu0
  %v354 = vadd.f32 %v262, %v353
  %v355 = vpop.f32.mrf.mxu0
  %356 = vmatprep.mubr.f32.mxu0 0.0
  %357 = vmatmul.mubr.f32.gmra.mxu0 %v279
  %v358 = vpop.f32.mrf.mxu0
  %v359 = vadd.f32 %v267, %v358
  %v360 = vpop.f32.mrf.mxu0
  %361 = vmatprep.mubr.f32.mxu0 0.0
  %362 = vmatmul.mubr.f32.gmra.mxu0 %v282
  %v363 = vpop.f32.mrf.mxu0
  %v364 = vadd.f32 %v272, %v363
  %v365 = vpop.f32.mrf.mxu0
  %366 = vdwg.mxu0
  %368 = vset.pattern.permute.xlu0 0
  %369 = vperm.xlu0 %368, %v65
  %v370 = vpop.permute.xlu0 %369
  %373 = vset.pattern.permute.xlu0 0
  %374 = vperm.xlu0 %373, %v66
  %v375 = vpop.permute.xlu0 %374
  %378 = vset.pattern.permute.xlu0 0
  %379 = vperm.xlu0 %378, %v67
  %v380 = vpop.permute.xlu0 %379
  %383 = vset.pattern.permute.xlu0 0
  %384 = vperm.xlu0 %383, %v68
  %v385 = vpop.permute.xlu0 %384
  %388 = vset.pattern.permute.xlu0 0
  %389 = vperm.xlu0 %388, %v69
  %v390 = vpop.permute.xlu0 %389
  %393 = vset.pattern.permute.xlu0 0
  %394 = vperm.xlu0 %393, %v70
  %v395 = vpop.permute.xlu0 %394
  %v397 = vsel %vm149, %v370, %v385
  %v398 = vsel %vm149, %v375, %v390
  %v399 = vsel %vm149, %v380, %v395
  %v400 = vadd.f32 %v354, %v397
  %v401 = vadd.f32 %v359, %v398
  %v402 = vadd.f32 %v364, %v399
  %v403 = vsel %vm149, %v400, 0.0
  %v404 = vsel %vm149, %v401, 0.0
  %v405 = vsel %vm149, %v402, 0.0
  %v406 = vsel %vm149, 0.0, %v400
  %v407 = vsel %vm149, 0.0, %v401
  %v408 = vsel %vm149, 0.0, %v402
  %vm409 = vcmask 392192
  %v411 = vsel %vm409, %v53, 0
  %v414 = vsel %vm409, %v54, 0
  %v417 = vsel %vm409, %v55, 0
  %v420 = vsel %vm409, %v56, 0
  %v423 = vsel %vm409, %v57, 0
  %v426 = vsel %vm409, %v58, 0
  %v429 = vsel %vm409, %v59, 0
  %v432 = vsel %vm409, %v60, 0
  %v435 = vsel %vm409, %v61, 0
  %v438 = vsel %vm409, %v62, 0
  %v441 = vsel %vm409, %v63, 0
  %v444 = vsel %vm409, %v64, 0
  %446 = vmatprep.subr.mxu0 0.0
  %447 = vmatpush1.msra.mxu0 0.0
  %448 = vmatprep.subr.mxu0 0.0
  %449 = vmatpush1.msra.mxu0 0.0
  %450 = vmatprep.subr.mxu0 0.0
  %451 = vmatpush1.msra.mxu0 0.0
  %452 = vmatprep.subr.mxu0 0.0
  %453 = vmatpush1.msra.mxu0 0.0
  %454 = vmatprep.subr.mxu0 0.0
  %455 = vmatpush1.msra.mxu0 0.0
  %456 = vmatprep.subr.mxu0 0.0
  %457 = vmatpush1.msra.mxu0 0.0
  %458 = vmatprep.subr.mxu0 0.0
  %459 = vmatpush1.msra.mxu0 0.0
  %460 = vmatprep.subr.mxu0 0.0
  %461 = vmatpush1.msra.mxu0 0.0
  %462 = vmatprep.subr.mxu0 0.0
  %463 = vmatpush1.msra.mxu0 0.0
  %464 = vmatprep.subr.mxu0 0.0
  %465 = vmatpush1.msra.mxu0 0.0
  %466 = vmatprep.subr.mxu0 0.0
  %467 = vmatpush1.msra.mxu0 %v408
  %468 = vmatprep.subr.mxu0 0.0
  %469 = vmatpush1.msra.mxu0 %v407
  %470 = vmatprep.subr.mxu0 0.0
  %471 = vmatpush1.msra.mxu0 %v406
  %472 = vmatprep.subr.mxu0 0.0
  %473 = vmatpush1.msra.mxu0 %v405
  %474 = vmatprep.subr.mxu0 0.0
  %475 = vmatpush1.msra.mxu0 %v404
  %476 = vmatprep.subr.mxu0 0.0
  %477 = vmatpush1.msra.mxu0 %v403
  %478 = vmatprep.subr.mxu0 0.0
  %479 = vmatpush2.msra.mxu0 0.0
  %480 = vmatprep.subr.mxu0 0.0
  %481 = vmatpush2.msra.mxu0 0.0
  %482 = vmatprep.subr.mxu0 0.0
  %483 = vmatpush2.msra.mxu0 0.0
  %484 = vmatprep.subr.mxu0 0.0
  %485 = vmatpush2.msra.mxu0 0.0
  %486 = vmatprep.subr.mxu0 0.0
  %487 = vmatpush2.msra.mxu0 0.0
  %488 = vmatprep.subr.mxu0 0.0
  %489 = vmatpush2.msra.mxu0 0.0
  %490 = vmatprep.subr.mxu0 0.0
  %491 = vmatpush2.msra.mxu0 0.0
  %492 = vmatprep.subr.mxu0 0.0
  %493 = vmatpush2.msra.mxu0 0.0
  %494 = vmatprep.subr.mxu0 0.0
  %495 = vmatpush2.msra.mxu0 0.0
  %496 = vmatprep.subr.mxu0 0.0
  %497 = vmatpush2.msra.mxu0 0.0
  %498 = vmatprep.subr.mxu0 0.0
  %499 = vmatpush2.msra.mxu0 0.0
  %500 = vmatprep.subr.mxu0 0.0
  %501 = vmatpush2.msra.mxu0 0.0
  %502 = vmatprep.subr.mxu0 0.0
  %503 = vmatpush2.msra.mxu0 0.0
  %504 = vmatprep.subr.mxu0 0.0
  %505 = vmatpush2.msra.mxu0 0.0
  %506 = vmatprep.subr.mxu0 0.0
  %507 = vmatpush2.msra.mxu0 0.0
  %508 = vmatprep.subr.mxu0 0.0
  %509 = vmatpush2.msra.mxu0 0.0
  %510 = vmatprep.mubr.f32.mxu0 0.0
  %511 = vmatmul.mubr.f32.gmra.mxu0 %v411
  %v512 = vpop.f32.mrf.mxu0
  %v513 = vadd.f32 0.0, %v512
  %v514 = vpop.f32.mrf.mxu0
  %515 = vmatprep.mubr.f32.mxu0 0.0
  %516 = vmatmul.mubr.f32.gmra.mxu0 %v414
  %v517 = vpop.f32.mrf.mxu0
  %v518 = vadd.f32 0.0, %v517
  %v519 = vpop.f32.mrf.mxu0
  %520 = vmatprep.mubr.f32.mxu0 0.0
  %521 = vmatmul.mubr.f32.gmra.mxu0 %v417
  %v522 = vpop.f32.mrf.mxu0
  %v523 = vadd.f32 0.0, %v522
  %v524 = vpop.f32.mrf.mxu0
  %525 = vmatprep.mubr.f32.mxu0 0.0
  %526 = vmatmul.mubr.f32.gmra.mxu0 %v420
  %v527 = vpop.f32.mrf.mxu0
  %v528 = vadd.f32 0.0, %v527
  %v529 = vpop.f32.mrf.mxu0
  %530 = vmatprep.mubr.f32.mxu0 0.0
  %531 = vmatmul.mubr.f32.gmra.mxu0 %v423
  %v532 = vpop.f32.mrf.mxu0
  %v533 = vadd.f32 0.0, %v532
  %v534 = vpop.f32.mrf.mxu0
  %535 = vmatprep.mubr.f32.mxu0 0.0
  %536 = vmatmul.mubr.f32.gmra.mxu0 %v426
  %v537 = vpop.f32.mrf.mxu0
  %v538 = vadd.f32 0.0, %v537
  %v539 = vpop.f32.mrf.mxu0
  %540 = vmatprep.mubr.f32.mxu0 0.0
  %541 = vmatmul.mubr.f32.gmra.mxu0 %v429
  %v542 = vpop.f32.mrf.mxu0
  %v543 = vadd.f32 0.0, %v542
  %v544 = vpop.f32.mrf.mxu0
  %545 = vmatprep.mubr.f32.mxu0 0.0
  %546 = vmatmul.mubr.f32.gmra.mxu0 %v432
  %v547 = vpop.f32.mrf.mxu0
  %v548 = vadd.f32 0.0, %v547
  %v549 = vpop.f32.mrf.mxu0
  %550 = vmatprep.mubr.f32.mxu0 0.0
  %551 = vmatmul.mubr.f32.gmra.mxu0 %v435
  %v552 = vpop.f32.mrf.mxu0
  %v553 = vadd.f32 0.0, %v552
  %v554 = vpop.f32.mrf.mxu0
  %555 = vmatprep.mubr.f32.mxu0 0.0
  %556 = vmatmul.mubr.f32.gmra.mxu0 %v438
  %v557 = vpop.f32.mrf.mxu0
  %v558 = vadd.f32 0.0, %v557
  %v559 = vpop.f32.mrf.mxu0
  %560 = vmatprep.mubr.f32.mxu0 0.0
  %561 = vmatmul.mubr.f32.gmra.mxu0 %v441
  %v562 = vpop.f32.mrf.mxu0
  %v563 = vadd.f32 0.0, %v562
  %v564 = vpop.f32.mrf.mxu0
  %565 = vmatprep.mubr.f32.mxu0 0.0
  %566 = vmatmul.mubr.f32.gmra.mxu0 %v444
  %v567 = vpop.f32.mrf.mxu0
  %v568 = vadd.f32 0.0, %v567
  %v569 = vpop.f32.mrf.mxu0
  %570 = vdwg.mxu0
  %v571 = vsel %vm103, %v102, 1.0
  %v572 = vlaneseq
  %v573 = vshrl.u32 %v572, 7
  %v574 = vsub.s32 7, %v573
  %v575 = vrot.slane %v571, %v574
  %v576 = vmul.f32 %v513, %v575
  %v577 = vmul.f32 %v518, %v575
  %v578 = vmul.f32 %v523, %v575
  %v579 = vmul.f32 %v528, %v575
  %v580 = vmul.f32 %v533, %v575
  %v581 = vmul.f32 %v538, %v575
  %v582 = vmul.f32 %v543, %v575
  %v583 = vmul.f32 %v548, %v575
  %v584 = vmul.f32 %v553, %v575
  %v585 = vmul.f32 %v558, %v575
  %v586 = vmul.f32 %v563, %v575
  %v587 = vmul.f32 %v568, %v575
  %v588 = vmul.f32 %v576, %v127
  %v589 = vmul.f32 %v577, %v127
  %v590 = vmul.f32 %v578, %v127
  %v591 = vmul.f32 %v579, %v127
  %v592 = vmul.f32 %v580, %v127
  %v593 = vmul.f32 %v581, %v127
  %v594 = vmul.f32 %v582, %v132
  %v595 = vmul.f32 %v583, %v132
  %v596 = vmul.f32 %v584, %v132
  %v597 = vmul.f32 %v585, %v132
  %v598 = vmul.f32 %v586, %v132
  %v599 = vmul.f32 %v587, %v132
  %v600 = vsub.f32 %v588, %v594
  %v601 = vsub.f32 %v589, %v595
  %v602 = vsub.f32 %v590, %v596
  %v603 = vsub.f32 %v591, %v597
  %v604 = vsub.f32 %v592, %v598
  %v605 = vsub.f32 %v593, %v599
  %v606 = vadd.f32 %v600, %v117
  %v607 = vadd.f32 %v601, %v117
  %v608 = vadd.f32 %v602, %v117
  %v609 = vadd.f32 %v603, %v117
  %v610 = vadd.f32 %v604, %v117
  %v611 = vadd.f32 %v605, %v117
  %v612 = vmul.f32 %v576, %v132
  %v613 = vmul.f32 %v577, %v132
  %v614 = vmul.f32 %v578, %v132
  %v615 = vmul.f32 %v579, %v132
  %v616 = vmul.f32 %v580, %v132
  %v617 = vmul.f32 %v581, %v132
  %v618 = vmul.f32 %v582, %v127
  %v619 = vmul.f32 %v583, %v127
  %v620 = vmul.f32 %v584, %v127
  %v621 = vmul.f32 %v585, %v127
  %v622 = vmul.f32 %v586, %v127
  %v623 = vmul.f32 %v587, %v127
  %v624 = vadd.f32 %v612, %v618
  %v625 = vadd.f32 %v613, %v619
  %v626 = vadd.f32 %v614, %v620
  %v627 = vadd.f32 %v615, %v621
  %v628 = vadd.f32 %v616, %v622
  %v629 = vadd.f32 %v617, %v623
  %v630 = vadd.f32 %v624, %v122
  %v631 = vadd.f32 %v625, %v122
  %v632 = vadd.f32 %v626, %v122
  %v633 = vadd.f32 %v627, %v122
  %v634 = vadd.f32 %v628, %v122
  %v635 = vadd.f32 %v629, %v122
  %v636 = vsub.f32 %v77, %v117
  %v637 = vsub.f32 %v78, %v117
  %v638 = vsub.f32 %v79, %v122
  %v639 = vsub.f32 %v80, %v122
  %v640 = vmul.f32 %v636, %v127
  %v641 = vmul.f32 %v637, %v127
  %v642 = vmul.f32 %v638, %v132
  %v643 = vmul.f32 %v639, %v132
  %v644 = vadd.f32 %v640, %v642
  %v645 = vadd.f32 %v641, %v643
  %v646 = vsub.f32 0.0, %v636
  %v647 = vsub.f32 0.0, %v637
  %v648 = vmul.f32 %v646, %v132
  %v649 = vmul.f32 %v647, %v132
  %v650 = vmul.f32 %v638, %v127
  %v651 = vmul.f32 %v639, %v127
  %v652 = vadd.f32 %v648, %v650
  %v653 = vadd.f32 %v649, %v651
  %v654 = vmul.f32 %v644, %v142
  %v655 = vmul.f32 %v645, %v142
  %v656 = vsel %vm149, %v654, 0.0
  %v657 = vsel %vm149, %v655, 0.0
  %v658 = vmul.f32 %v652, %v142
  %v659 = vmul.f32 %v653, %v142
  %v660 = vsel %vm149, %v658, 0.0
  %v661 = vsel %vm149, %v659, 0.0
  %v662 = vsel %vm149, 0.0, %v644
  %v663 = vsel %vm149, 0.0, %v645
  %v664 = vsel %vm149, 0.0, %v652
  %v665 = vsel %vm149, 0.0, %v653
  %v668 = vrot.slane %v660, 4
  %v669 = vrot.slane %v661, 4
  %v670 = vsel %vm244, %v668, %v669
  %v675 = vrot.slane %v664, 4
  %v676 = vrot.slane %v665, 4
  %v677 = vsel %vm244, %v675, %v676
  %v680 = vsel %vm244, %v657, %v668
  %v681 = vsel %vm244, %v663, %v675
  %v683 = vsel %vm409, %v81, 0
  %685 = vmatprep.subr.mxu0 0.0
  %686 = vmatpush1.msra.mxu0 0.0
  %687 = vmatprep.subr.mxu0 0.0
  %688 = vmatpush1.msra.mxu0 0.0
  %689 = vmatprep.subr.mxu0 0.0
  %690 = vmatpush1.msra.mxu0 0.0
  %691 = vmatprep.subr.mxu0 0.0
  %692 = vmatpush1.msra.mxu0 0.0
  %693 = vmatprep.subr.mxu0 0.0
  %694 = vmatpush1.msra.mxu0 0.0
  %695 = vmatprep.subr.mxu0 0.0
  %696 = vmatpush1.msra.mxu0 0.0
  %697 = vmatprep.subr.mxu0 0.0
  %698 = vmatpush1.msra.mxu0 0.0
  %699 = vmatprep.subr.mxu0 0.0
  %700 = vmatpush1.msra.mxu0 0.0
  %701 = vmatprep.subr.mxu0 0.0
  %702 = vmatpush1.msra.mxu0 0.0
  %703 = vmatprep.subr.mxu0 0.0
  %704 = vmatpush1.msra.mxu0 0.0
  %705 = vmatprep.subr.mxu0 0.0
  %706 = vmatpush1.msra.mxu0 %v677
  %707 = vmatprep.subr.mxu0 0.0
  %708 = vmatpush1.msra.mxu0 %v681
  %709 = vmatprep.subr.mxu0 0.0
  %710 = vmatpush1.msra.mxu0 %v662
  %711 = vmatprep.subr.mxu0 0.0
  %712 = vmatpush1.msra.mxu0 %v670
  %713 = vmatprep.subr.mxu0 0.0
  %714 = vmatpush1.msra.mxu0 %v680
  %715 = vmatprep.subr.mxu0 0.0
  %716 = vmatpush1.msra.mxu0 %v656
  %717 = vmatprep.subr.mxu0 0.0
  %718 = vmatpush2.msra.mxu0 0.0
  %719 = vmatprep.subr.mxu0 0.0
  %720 = vmatpush2.msra.mxu0 0.0
  %721 = vmatprep.subr.mxu0 0.0
  %722 = vmatpush2.msra.mxu0 0.0
  %723 = vmatprep.subr.mxu0 0.0
  %724 = vmatpush2.msra.mxu0 0.0
  %725 = vmatprep.subr.mxu0 0.0
  %726 = vmatpush2.msra.mxu0 0.0
  %727 = vmatprep.subr.mxu0 0.0
  %728 = vmatpush2.msra.mxu0 0.0
  %729 = vmatprep.subr.mxu0 0.0
  %730 = vmatpush2.msra.mxu0 0.0
  %731 = vmatprep.subr.mxu0 0.0
  %732 = vmatpush2.msra.mxu0 0.0
  %733 = vmatprep.subr.mxu0 0.0
  %734 = vmatpush2.msra.mxu0 0.0
  %735 = vmatprep.subr.mxu0 0.0
  %736 = vmatpush2.msra.mxu0 0.0
  %737 = vmatprep.subr.mxu0 0.0
  %738 = vmatpush2.msra.mxu0 0.0
  %739 = vmatprep.subr.mxu0 0.0
  %740 = vmatpush2.msra.mxu0 0.0
  %741 = vmatprep.subr.mxu0 0.0
  %742 = vmatpush2.msra.mxu0 0.0
  %743 = vmatprep.subr.mxu0 0.0
  %744 = vmatpush2.msra.mxu0 0.0
  %745 = vmatprep.subr.mxu0 0.0
  %746 = vmatpush2.msra.mxu0 0.0
  %747 = vmatprep.subr.mxu0 0.0
  %748 = vmatpush2.msra.mxu0 0.0
  %749 = vmatprep.mubr.f32.mxu0 0.0
  %750 = vmatmul.mubr.f32.gmra.mxu0 %v683
  %v751 = vpop.f32.mrf.mxu0
  %v752 = vadd.f32 0.0, %v751
  %v753 = vpop.f32.mrf.mxu0
  %754 = vdwg.mxu0
  %v756 = vrot.slane %v752, 2
  %v758 = vrot.slane %v752, 4
  %v760 = vrot.slane %v752, 6
  %v762 = vsel %vm255, %v752, %v756
  %v763 = vsel %vm244, %v756, %v758
  %vm764 = vcmask 1041408
  %v765 = vsel %vm764, %v758, %v760
  %v766 = vsub.f32 %v400, %v762
  %v767 = vsub.f32 %v401, %v763
  %v768 = vsub.f32 %v402, %v765
  %v769 = vmul.f32 %v766, %v766
  %v770 = vmul.f32 %v767, %v767
  %v771 = vmul.f32 %v768, %v768
  %vm772 = vcmask 195584
  %v774 = vsel %vm772, %v82, 0
  %776 = vmatprep.subr.mxu0 0.0
  %777 = vmatpush1.msra.mxu0 0.0
  %778 = vmatprep.subr.mxu0 0.0
  %779 = vmatpush1.msra.mxu0 0.0
  %780 = vmatprep.subr.mxu0 0.0
  %781 = vmatpush1.msra.mxu0 0.0
  %782 = vmatprep.subr.mxu0 0.0
  %783 = vmatpush1.msra.mxu0 0.0
  %784 = vmatprep.subr.mxu0 0.0
  %785 = vmatpush1.msra.mxu0 0.0
  %786 = vmatprep.subr.mxu0 0.0
  %787 = vmatpush1.msra.mxu0 0.0
  %788 = vmatprep.subr.mxu0 0.0
  %789 = vmatpush1.msra.mxu0 0.0
  %790 = vmatprep.subr.mxu0 0.0
  %791 = vmatpush1.msra.mxu0 0.0
  %792 = vmatprep.subr.mxu0 0.0
  %793 = vmatpush1.msra.mxu0 0.0
  %794 = vmatprep.subr.mxu0 0.0
  %795 = vmatpush1.msra.mxu0 0.0
  %796 = vmatprep.subr.mxu0 0.0
  %797 = vmatpush1.msra.mxu0 0.0
  %798 = vmatprep.subr.mxu0 0.0
  %799 = vmatpush1.msra.mxu0 0.0
  %800 = vmatprep.subr.mxu0 0.0
  %801 = vmatpush1.msra.mxu0 0.0
  %802 = vmatprep.subr.mxu0 0.0
  %803 = vmatpush1.msra.mxu0 %v771
  %804 = vmatprep.subr.mxu0 0.0
  %805 = vmatpush1.msra.mxu0 %v770
  %806 = vmatprep.subr.mxu0 0.0
  %807 = vmatpush1.msra.mxu0 %v769
  %808 = vmatprep.subr.mxu0 0.0
  %809 = vmatpush2.msra.mxu0 0.0
  %810 = vmatprep.subr.mxu0 0.0
  %811 = vmatpush2.msra.mxu0 0.0
  %812 = vmatprep.subr.mxu0 0.0
  %813 = vmatpush2.msra.mxu0 0.0
  %814 = vmatprep.subr.mxu0 0.0
  %815 = vmatpush2.msra.mxu0 0.0
  %816 = vmatprep.subr.mxu0 0.0
  %817 = vmatpush2.msra.mxu0 0.0
  %818 = vmatprep.subr.mxu0 0.0
  %819 = vmatpush2.msra.mxu0 0.0
  %820 = vmatprep.subr.mxu0 0.0
  %821 = vmatpush2.msra.mxu0 0.0
  %822 = vmatprep.subr.mxu0 0.0
  %823 = vmatpush2.msra.mxu0 0.0
  %824 = vmatprep.subr.mxu0 0.0
  %825 = vmatpush2.msra.mxu0 0.0
  %826 = vmatprep.subr.mxu0 0.0
  %827 = vmatpush2.msra.mxu0 0.0
  %828 = vmatprep.subr.mxu0 0.0
  %829 = vmatpush2.msra.mxu0 0.0
  %830 = vmatprep.subr.mxu0 0.0
  %831 = vmatpush2.msra.mxu0 0.0
  %832 = vmatprep.subr.mxu0 0.0
  %833 = vmatpush2.msra.mxu0 0.0
  %834 = vmatprep.subr.mxu0 0.0
  %835 = vmatpush2.msra.mxu0 0.0
  %836 = vmatprep.subr.mxu0 0.0
  %837 = vmatpush2.msra.mxu0 0.0
  %838 = vmatprep.subr.mxu0 0.0
  %839 = vmatpush2.msra.mxu0 0.0
  %840 = vmatprep.mubr.f32.mxu0 0.0
  %841 = vmatmul.mubr.f32.gmra.mxu0 %v774
  %v842 = vpop.f32.mrf.mxu0
  %v843 = vadd.f32 0.0, %v842
  %v844 = vpop.f32.mrf.mxu0
  %845 = vdwg.mxu0
  %v846 = vrsqrt.pop %v843
  %v847 = vmul.f32 %v843, %v846
  %vm848 = vcmp.eq.f32.partialorder %v843, inf
  %v849 = vsel %vm848, %v843, %v847
  %vm850 = vcmp.eq.f32.partialorder %v843, 0.0
  %v851 = vand.u32 %v843, 2147483648
  %v852 = vsel %vm850, %v851, %v849
  %vm853 = vcmask 60416
  %v854 = vsel %vm853, %v852, inf
  %v855 = vrot.slane %v854, 4
  %v856 = vmin.f32 %v854, %v855
  %v857 = vrot.slane %v856, 2
  %v858 = vmin.f32 %v856, %v857
  %v859 = vrot.slane %v858, 1
  %v860 = vmin.f32 %v858, %v859
  %vm861 = vcmask 64512
  %v862 = vsel %vm861, %v860, 0.0
  %863 = vadd.xlane.f32.xlu0 %v862
  %v864 = vpop.xlane.xlu0 %863
  %v865 = vmul.f32 %v864, %v233
  %v868 = vrot.slane %v77, 4
  %v869 = vrot.slane %v78, 4
  %v870 = vsel %vm244, %v868, %v869
  %v873 = vsel %vm244, %v78, %v868
  %v874 = vsub.f32 %v606, %v77
  %v875 = vsub.f32 %v607, %v873
  %v876 = vsub.f32 %v608, %v870
  %v877 = vsub.f32 %v609, %v77
  %v878 = vsub.f32 %v610, %v873
  %v879 = vsub.f32 %v611, %v870
  %v882 = vrot.slane %v79, 4
  %v883 = vrot.slane %v80, 4
  %v884 = vsel %vm244, %v882, %v883
  %v887 = vsel %vm244, %v80, %v882
  %v888 = vsub.f32 %v630, %v79
  %v889 = vsub.f32 %v631, %v887
  %v890 = vsub.f32 %v632, %v884
  %v891 = vsub.f32 %v633, %v79
  %v892 = vsub.f32 %v634, %v887
  %v893 = vsub.f32 %v635, %v884
  %v894 = vmul.f32 %v874, %v874
  %v895 = vmul.f32 %v875, %v875
  %v896 = vmul.f32 %v876, %v876
  %v897 = vmul.f32 %v877, %v877
  %v898 = vmul.f32 %v878, %v878
  %v899 = vmul.f32 %v879, %v879
  %v900 = vmul.f32 %v888, %v888
  %v901 = vmul.f32 %v889, %v889
  %v902 = vmul.f32 %v890, %v890
  %v903 = vmul.f32 %v891, %v891
  %v904 = vmul.f32 %v892, %v892
  %v905 = vmul.f32 %v893, %v893
  %v906 = vadd.f32 %v894, %v900
  %v907 = vadd.f32 %v895, %v901
  %v908 = vadd.f32 %v896, %v902
  %v909 = vadd.f32 %v897, %v903
  %v910 = vadd.f32 %v898, %v904
  %v911 = vadd.f32 %v899, %v905
  %v912 = vrsqrt.pop %v906
  %v913 = vmul.f32 %v906, %v912
  %vm914 = vcmp.eq.f32.partialorder %v906, inf
  %v915 = vsel %vm914, %v906, %v913
  %vm916 = vcmp.eq.f32.partialorder %v906, 0.0
  %v917 = vand.u32 %v906, 2147483648
  %v918 = vsel %vm916, %v917, %v915
  %v919 = vrsqrt.pop %v907
  %v920 = vmul.f32 %v907, %v919
  %vm921 = vcmp.eq.f32.partialorder %v907, inf
  %v922 = vsel %vm921, %v907, %v920
  %vm923 = vcmp.eq.f32.partialorder %v907, 0.0
  %v924 = vand.u32 %v907, 2147483648
  %v925 = vsel %vm923, %v924, %v922
  %v926 = vrsqrt.pop %v908
  %v927 = vmul.f32 %v908, %v926
  %vm928 = vcmp.eq.f32.partialorder %v908, inf
  %v929 = vsel %vm928, %v908, %v927
  %vm930 = vcmp.eq.f32.partialorder %v908, 0.0
  %v931 = vand.u32 %v908, 2147483648
  %v932 = vsel %vm930, %v931, %v929
  %v933 = vrsqrt.pop %v909
  %v934 = vmul.f32 %v909, %v933
  %vm935 = vcmp.eq.f32.partialorder %v909, inf
  %v936 = vsel %vm935, %v909, %v934
  %vm937 = vcmp.eq.f32.partialorder %v909, 0.0
  %v938 = vand.u32 %v909, 2147483648
  %v939 = vsel %vm937, %v938, %v936
  %v940 = vrsqrt.pop %v910
  %v941 = vmul.f32 %v910, %v940
  %vm942 = vcmp.eq.f32.partialorder %v910, inf
  %v943 = vsel %vm942, %v910, %v941
  %vm944 = vcmp.eq.f32.partialorder %v910, 0.0
  %v945 = vand.u32 %v910, 2147483648
  %v946 = vsel %vm944, %v945, %v943
  %v947 = vrsqrt.pop %v911
  %v948 = vmul.f32 %v911, %v947
  %vm949 = vcmp.eq.f32.partialorder %v911, inf
  %v950 = vsel %vm949, %v911, %v948
  %vm951 = vcmp.eq.f32.partialorder %v911, 0.0
  %v952 = vand.u32 %v911, 2147483648
  %v953 = vsel %vm951, %v952, %v950
  %v955 = vsel %vm409, %v83, 0
  %957 = vmatprep.subr.mxu0 0.0
  %958 = vmatpush1.msra.mxu0 0.0
  %959 = vmatprep.subr.mxu0 0.0
  %960 = vmatpush1.msra.mxu0 0.0
  %961 = vmatprep.subr.mxu0 0.0
  %962 = vmatpush1.msra.mxu0 0.0
  %963 = vmatprep.subr.mxu0 0.0
  %964 = vmatpush1.msra.mxu0 0.0
  %965 = vmatprep.subr.mxu0 0.0
  %966 = vmatpush1.msra.mxu0 0.0
  %967 = vmatprep.subr.mxu0 0.0
  %968 = vmatpush1.msra.mxu0 0.0
  %969 = vmatprep.subr.mxu0 0.0
  %970 = vmatpush1.msra.mxu0 0.0
  %971 = vmatprep.subr.mxu0 0.0
  %972 = vmatpush1.msra.mxu0 0.0
  %973 = vmatprep.subr.mxu0 0.0
  %974 = vmatpush1.msra.mxu0 0.0
  %975 = vmatprep.subr.mxu0 0.0
  %976 = vmatpush1.msra.mxu0 0.0
  %977 = vmatprep.subr.mxu0 0.0
  %978 = vmatpush1.msra.mxu0 %v953
  %979 = vmatprep.subr.mxu0 0.0
  %980 = vmatpush1.msra.mxu0 %v946
  %981 = vmatprep.subr.mxu0 0.0
  %982 = vmatpush1.msra.mxu0 %v939
  %983 = vmatprep.subr.mxu0 0.0
  %984 = vmatpush1.msra.mxu0 %v932
  %985 = vmatprep.subr.mxu0 0.0
  %986 = vmatpush1.msra.mxu0 %v925
  %987 = vmatprep.subr.mxu0 0.0
  %988 = vmatpush1.msra.mxu0 %v918
  %989 = vmatprep.subr.mxu0 0.0
  %990 = vmatpush2.msra.mxu0 0.0
  %991 = vmatprep.subr.mxu0 0.0
  %992 = vmatpush2.msra.mxu0 0.0
  %993 = vmatprep.subr.mxu0 0.0
  %994 = vmatpush2.msra.mxu0 0.0
  %995 = vmatprep.subr.mxu0 0.0
  %996 = vmatpush2.msra.mxu0 0.0
  %997 = vmatprep.subr.mxu0 0.0
  %998 = vmatpush2.msra.mxu0 0.0
  %999 = vmatprep.subr.mxu0 0.0
  %1000 = vmatpush2.msra.mxu0 0.0
  %1001 = vmatprep.subr.mxu0 0.0
  %1002 = vmatpush2.msra.mxu0 0.0
  %1003 = vmatprep.subr.mxu0 0.0
  %1004 = vmatpush2.msra.mxu0 0.0
  %1005 = vmatprep.subr.mxu0 0.0
  %1006 = vmatpush2.msra.mxu0 0.0
  %1007 = vmatprep.subr.mxu0 0.0
  %1008 = vmatpush2.msra.mxu0 0.0
  %1009 = vmatprep.subr.mxu0 0.0
  %1010 = vmatpush2.msra.mxu0 0.0
  %1011 = vmatprep.subr.mxu0 0.0
  %1012 = vmatpush2.msra.mxu0 0.0
  %1013 = vmatprep.subr.mxu0 0.0
  %1014 = vmatpush2.msra.mxu0 0.0
  %1015 = vmatprep.subr.mxu0 0.0
  %1016 = vmatpush2.msra.mxu0 0.0
  %1017 = vmatprep.subr.mxu0 0.0
  %1018 = vmatpush2.msra.mxu0 0.0
  %1019 = vmatprep.subr.mxu0 0.0
  %1020 = vmatpush2.msra.mxu0 0.0
  %1021 = vmatprep.mubr.f32.mxu0 0.0
  %1022 = vmatmul.mubr.f32.gmra.mxu0 %v955
  %v1023 = vpop.f32.mrf.mxu0
  %v1024 = vadd.f32 0.0, %v1023
  %v1025 = vpop.f32.mrf.mxu0
  %1026 = vdwg.mxu0
  %v1027 = vsel %vm853, %v1024, inf
  %v1028 = vrot.slane %v1027, 4
  %v1029 = vmin.f32 %v1027, %v1028
  %v1030 = vrot.slane %v1029, 2
  %v1031 = vmin.f32 %v1029, %v1030
  %v1032 = vrot.slane %v1031, 1
  %v1033 = vmin.f32 %v1031, %v1032
  %v1034 = vsel %vm861, %v1033, 0.0
  %1035 = vadd.xlane.f32.xlu0 %v1034
  %v1036 = vpop.xlane.xlu0 %1035
  %v1037 = vmul.f32 %v1036, %v233
  %vm1038 = vcmask 64516
  %v1039 = vsel %vm1038, %v1024, inf
  %v1040 = vrot.slane %v1039, 4
  %v1041 = vmin.f32 %v1039, %v1040
  %v1042 = vrot.slane %v1041, 2
  %v1043 = vmin.f32 %v1041, %v1042
  %v1044 = vrot.slane %v1043, 1
  %v1045 = vmin.f32 %v1043, %v1044
  %v1046 = vsel %vm861, %v1045, 0.0
  %1047 = vadd.xlane.f32.xlu0 %v1046
  %v1048 = vpop.xlane.xlu0 %1047
  %v1049 = vmul.f32 %v1048, %v233
  %vm1050 = vcmask 1040384
  %v1051 = vsel %vm1050, %v865, %v1037
  %v1052 = vsel %vm764, %v1051, %v1049
  %vm1053 = vcmask 1042432
  %v1054 = vsel %vm1053, %v1052, 0.0
  %1055 = vst.msk [vmem:[%s14] sm:$0xff] %vm861, %v606
  %1056 = vst.msk [vmem:[%s14 + $0x8] sm:$0xff] %vm861, %v607
  %1057 = vst.msk [vmem:[%s14 + $0x10] sm:$0xff] %vm861, %v608
  %1058 = vst.msk [vmem:[%s14 + $0x18] sm:$0xff] %vm861, %v609
  %1059 = vst.msk [vmem:[%s14 + $0x20] sm:$0xff] %vm861, %v610
  %1060 = vst.msk [vmem:[%s14 + $0x28] sm:$0xff] %vm861, %v611
  %1061 = vst.msk [vmem:[%s14 + $0x30] sm:$0xff] %vm861, %v630
  %1062 = vst.msk [vmem:[%s14 + $0x38] sm:$0xff] %vm861, %v631
  %1063 = vst.msk [vmem:[%s14 + $0x40] sm:$0xff] %vm861, %v632
  %1064 = vst.msk [vmem:[%s14 + $0x48] sm:$0xff] %vm861, %v633
  %1065 = vst.msk [vmem:[%s14 + $0x50] sm:$0xff] %vm861, %v634
  %1066 = vst.msk [vmem:[%s14 + $0x58] sm:$0xff] %vm861, %v635
  %vm1067 = vcmask 3072
  %1068 = vst.msk [vmem:[%s15] sm:$0xf] %vm1067, %v1054
  // Predicated region
  $region58: #{eigentrajectory_forward.1} parent=0 // pred_check
    _
  $region59: #{eigentrajectory_forward.1} parent=0 // pred_check_branch
    %1070 = sbr.rel (0) target = $region61
  $region60: #{eigentrajectory_forward.1} parent=0 // pred_region
    _
  $region61: #{eigentrajectory_forward.1} parent=0 // pred_fallthru
    _
  // Predicated region
  $region62: #{eigentrajectory_forward.1} parent=0 // pred_check
    _
  $region63: #{eigentrajectory_forward.1} parent=0 // pred_check_branch
    %1072 = sbr.rel (0) target = $region65
  $region64: #{eigentrajectory_forward.1} parent=0 // pred_region
    _
  $region65: #{eigentrajectory_forward.1} parent=0 // pred_fallthru
    _
  // Predicated region
  $region66: #{eigentrajectory_forward.1} parent=0 // pred_check
    _
  $region67: #{eigentrajectory_forward.1} parent=0 // pred_check_branch
    %1074 = sbr.rel (0) target = $region69
  $region68: #{eigentrajectory_forward.1} parent=0 // pred_region
    _
  $region69: #{eigentrajectory_forward.1} parent=0 // pred_fallthru
    _
  // Predicated region
  $region70: #{eigentrajectory_forward.1} parent=0 // pred_check
    _
  $region71: #{eigentrajectory_forward.1} parent=0 // pred_check_branch
    %1076 = sbr.rel (0) target = $region73
  $region72: #{eigentrajectory_forward.1} parent=0 // pred_region
    _
  $region73: #{eigentrajectory_forward.1} parent=0 // pred_fallthru
    _

</llo_original>
